<compile_context>
chip_gen: v6e
topology: v6e:2x2x1
jax: 0.10.0
libtpu: 0.0.40
codegen_flags: <defaults>
</compile_context>

<pallas_src>
import functools
import math

import jax
import jax.numpy as jnp
from jax.experimental import pallas as pl
from jax.experimental.pallas import tpu as pltpu


_MASK_BIAS = -0.7 * float(jnp.finfo(jnp.float32).max)  # finite "minus infinity"


def _round_up(x, m):
    return (x + m - 1) // m * m


def _pick_tile(dim, candidates=(512, 256, 128)):
    for c in candidates:
        if dim % c == 0:
            return c
    return dim


# ----------------------------- QKV projection --------------------------------


def qkv_proj_kernel(x_ref, w_ref, b_ref, o_ref, acc_ref):
    # Tiled matmul: o = x @ w + b; bf16 MXU inputs, f32 accumulation over the K axis.
    k = pl.program_id(2)

    @pl.when(k == 0)
    def _():
        acc_ref[...] = jnp.zeros_like(acc_ref)

    acc_ref[...] += jnp.dot(x_ref[...].astype(jnp.bfloat16), w_ref[...],
                            preferred_element_type=jnp.float32)

    @pl.when(k == pl.num_programs(2) - 1)
    def _():
        o_ref[...] = (acc_ref[...] + b_ref[...]).astype(o_ref.dtype)


# -------------------------- Varlen flash attention ---------------------------


def flash_varlen_kernel(kvlo_ref, kvn_ref, qslo_ref, qshi_ref, kslo_ref, kshi_ref,
                        segq_ref, segk_ref, q_ref, k_ref, v_ref, o_ref,
                        m_sc, l_sc, acc_sc):
    # Grid: (head, q-block, kv-step).  q/k/v are bf16 per-head column slabs of the
    # packed qkv matrix; the softmax scale is pre-folded into q.
    qi = pl.program_id(1)
    ki = pl.program_id(2)

    n_valid = kvn_ref[qi]                                   # kv blocks needed by this q block
    kv_blk = kvlo_ref[qi] + jnp.minimum(ki, n_valid - 1)    # clamped (skipped steps reuse it)
    valid = ki < n_valid
    # Tile fully inside one packed sequence -> no mask work needed.
    uniform = jnp.logical_and(qslo_ref[qi] == qshi_ref[qi],
                              kslo_ref[kv_blk] == kshi_ref[kv_blk])
    same_seg = jnp.logical_and(uniform, qslo_ref[qi] == kslo_ref[kv_blk])

    @pl.when(ki == 0)
    def _():
        m_sc[...] = jnp.full_like(m_sc, _MASK_BIAS)
        l_sc[...] = jnp.zeros_like(l_sc)
        acc_sc[...] = jnp.zeros_like(acc_sc)

    def step(apply_mask):
        s = jax.lax.dot_general(q_ref[...], k_ref[...], (((1,), (1,)), ((), ())),
                                preferred_element_type=jnp.float32)       # (TQ, TKV)
        if apply_mask:
            mask = segq_ref[...] == segk_ref[...]       # (TQ,1)==(1,TKV) -> (TQ,TKV)
            s = jnp.where(mask, s, _MASK_BIAS)

        # online softmax update
        m_prev = m_sc[...]
        m_new = jnp.maximum(m_prev, jnp.max(s, axis=-1, keepdims=True))
        alpha = jnp.exp(m_prev - m_new)
        p = jnp.exp(s - m_new)
        if apply_mask:
            p = jnp.where(mask, p, 0.0)                 # fully-masked rows stay exactly zero
        l_sc[...] = alpha * l_sc[...] + jnp.sum(p, axis=-1, keepdims=True)
        acc_sc[...] = alpha * acc_sc[...] + jnp.dot(
            p.astype(jnp.bfloat16), v_ref[...], preferred_element_type=jnp.float32)
        m_sc[...] = m_new

    @pl.when(jnp.logical_and(valid, same_seg))
    def _():
        step(apply_mask=False)

    @pl.when(jnp.logical_and(valid, jnp.logical_not(same_seg)))
    def _():
        step(apply_mask=True)

    @pl.when(ki == n_valid - 1)                         # last *valid* kv step for this q block
    def _():
        o_ref[...] = (acc_sc[...] *
                      pl.reciprocal(l_sc[...], approx=True)).astype(o_ref.dtype)


# ------------------------------ Module wrapper --------------------------------


class MultiHeadAttentionVarLenPallas:
    def __init__(self, hid_dim, n_heads, key, *, tq=128, tkv=256):
        assert hid_dim % n_heads == 0, "hid_dim must be divisible by n_heads"
        self.hid_dim = hid_dim
        self.n_heads = n_heads
        self.head_dim = hid_dim // n_heads
        self.tq = tq
        self.tkv = tkv
        # NOTE: module passes softmax_scale = sqrt(head_dim) (not 1/sqrt) — kept faithful.
        self.scale = float(math.sqrt(self.head_dim))

        # Deterministic synthetic params mimicking nn.Linear(hid, 3*hid) default init.
        wk, bk = jax.random.split(key)
        bound = 1.0 / math.sqrt(hid_dim)
        # Stored as (hid, 3*hid) == W^T so the kernel computes x @ W + b.
        self.w = jax.random.uniform(wk, (hid_dim, 3 * hid_dim), jnp.float32, -bound, bound)
        self.b = jax.random.uniform(bk, (1, 3 * hid_dim), jnp.float32, -bound, bound)

        # Kernel-side params: softmax scale folded into the q columns; weights in bf16.
        col_scale = jnp.concatenate([
            jnp.full((hid_dim,), self.scale, jnp.float32),
            jnp.ones((2 * hid_dim,), jnp.float32)])
        self._w_kern = (self.w * col_scale[None, :]).astype(jnp.bfloat16)
        self._b_kern = self.b * col_scale[None, :]

    def __call__(self, x, cu_seq_len, max_seqlen):
        total = x.shape[0]
        H, D, hid = self.n_heads, self.head_dim, self.hid_dim
        TQ, TKV = self.tq, self.tkv

        # Head dim sits on the lane axis of the packed qkv matrix.
        assert D % 128 == 0, "this Pallas port needs head_dim to be a multiple of 128"
        # TODO(synk): support head_dim < 128 by batching several heads per grid step.

        pad_mult = math.lcm(TQ, TKV)
        total_p = _round_up(total, pad_mult)
        if total_p != total:
            x = jnp.pad(x, ((0, total_p - total), (0, 0)))

        # --- QKV projection: tiled (M, N, K) matmul, bf16 MXU inputs, f32 accumulator ---
        tm = _pick_tile(total_p)
        tn = _pick_tile(3 * hid)
        tk = _pick_tile(hid)
        qkv = pl.pallas_call(
            qkv_proj_kernel,
            out_shape=jax.ShapeDtypeStruct((total_p, 3 * hid), jnp.bfloat16),
            grid=(total_p // tm, (3 * hid) // tn, hid // tk),
            in_specs=[
                pl.BlockSpec((tm, tk), lambda i, j, k: (i, k)),
                pl.BlockSpec((tk, tn), lambda i, j, k: (k, j)),
                pl.BlockSpec((1, tn), lambda i, j, k: (0, j)),
            ],
            out_specs=pl.BlockSpec((tm, tn), lambda i, j, k: (i, j)),
            scratch_shapes=[pltpu.VMEM((tm, tn), jnp.float32)],
            compiler_params=pltpu.CompilerParams(
                dimension_semantics=("parallel", "parallel", "arbitrary"),
                vmem_limit_bytes=32 * 1024 * 1024,
            ),
        )(x, self._w_kern, self._b_kern)

        # --- segment metadata from cu_seq_len (tiny trace-time JAX ops) ---
        cu = cu_seq_len.astype(jnp.int32)                           # (n_seqs + 1,)
        pos = jnp.arange(total_p, dtype=jnp.int32)
        seg = jnp.sum(pos[:, None] >= cu[None, 1:], axis=1).astype(jnp.int32)  # pad rows -> n_seqs
        seg_col = seg.reshape(total_p, 1)
        seg_row = seg.reshape(1, total_p)
        # segment end positions (pad segment ends at total_p)
        seg_end = jnp.concatenate([cu[1:], jnp.array([total_p], jnp.int32)])

        NQ = total_p // TQ
        NKV = total_p // TKV
        q_first = jnp.arange(NQ, dtype=jnp.int32) * TQ
        q_seg_lo = seg[q_first]                                     # first segment in q block
        q_seg_hi = seg[q_first + (TQ - 1)]                          # last segment in q block
        kv_lo_elem = cu[q_seg_lo]                                   # start of first segment
        kv_hi_elem = seg_end[q_seg_hi]                              # end of last segment
        kv_lo_blk = kv_lo_elem // TKV
        kv_nblk = (kv_hi_elem + TKV - 1) // TKV - kv_lo_blk         # >= 1 kv blocks per q block

        k_first = jnp.arange(NKV, dtype=jnp.int32) * TKV
        k_seg_lo = seg[k_first]
        k_seg_hi = seg[k_first + (TKV - 1)]

        # Static bound on kv steps per q block.  Uses max_seqlen as a launch hint, exactly
        # like flash_attn_varlen (an understated max_seqlen would be a contract violation).
        l_max = max(int(max_seqlen), pad_mult)
        nkv_grid = min(NKV, pl.cdiv(TQ + 2 * l_max - 2, TKV) + 1)

        def kv_block(qi, ki, kvlo, kvn):
            # clamped -> skipped steps keep the previous block index (no extra DMA)
            return kvlo[qi] + jnp.minimum(ki, kvn[qi] - 1)

        grid_spec = pltpu.PrefetchScalarGridSpec(
            num_scalar_prefetch=6,
            grid=(H, NQ, nkv_grid),
            in_specs=[
                pl.BlockSpec((TQ, 1), lambda h, qi, ki, *_: (qi, 0)),
                pl.BlockSpec((1, TKV),
                             lambda h, qi, ki, kvlo, kvn, *_: (0, kv_block(qi, ki, kvlo, kvn))),
                # q / k / v read straight out of the packed (total_p, 3*hid) bf16 matrix:
                pl.BlockSpec((TQ, D), lambda h, qi, ki, *_: (qi, h)),
                pl.BlockSpec((TKV, D),
                             lambda h, qi, ki, kvlo, kvn, *_: (kv_block(qi, ki, kvlo, kvn), H + h)),
                pl.BlockSpec((TKV, D),
                             lambda h, qi, ki, kvlo, kvn, *_: (kv_block(qi, ki, kvlo, kvn), 2 * H + h)),
            ],
            # Output written directly as lane-dense (total_p, hid): head h -> col block h.
            out_specs=pl.BlockSpec((TQ, D), lambda h, qi, ki, *_: (qi, h)),
            scratch_shapes=[
                pltpu.VMEM((TQ, 1), jnp.float32),   # m (running max)
                pltpu.VMEM((TQ, 1), jnp.float32),   # l (running denom)
                pltpu.VMEM((TQ, D), jnp.float32),   # acc
            ],
        )

        out_p = pl.pallas_call(
            flash_varlen_kernel,
            out_shape=jax.ShapeDtypeStruct((total_p, hid), jnp.float32),
            grid_spec=grid_spec,
            compiler_params=pltpu.CompilerParams(
                dimension_semantics=("parallel", "parallel", "arbitrary"),
                vmem_limit_bytes=32 * 1024 * 1024,
            ),
        )(kv_lo_blk, kv_nblk, q_seg_lo, q_seg_hi, k_seg_lo, k_seg_hi,
          seg_col, seg_row, qkv, qkv, qkv)

        return out_p[:total]


# ------------------------------ Pure-JAX reference ----------------------------


def reference_forward(x, w, b, cu_list, n_heads, scale):
    total, hid = x.shape
    hd = hid // n_heads
    qkv = (x @ w + b).reshape(total, 3, n_heads, hd)
    out = jnp.zeros((total, n_heads, hd), jnp.float32)
    for s, e in zip(cu_list[:-1], cu_list[1:]):
        q, k, v = qkv[s:e, 0], qkv[s:e, 1], qkv[s:e, 2]
        scores = jnp.einsum("qhd,khd->hqk", q, k) * scale
        p = jax.nn.softmax(scores, axis=-1)
        o = jnp.einsum("hqk,khd->qhd", p, v)
        out = out.at[s:e].set(o)
    return out.reshape(total, hid)


# ----------------------------------- Main --------------------------------------

if __name__ == "__main__":
    hid_dim, n_heads = 256, 2           # head_dim = 128 (lane-aligned)
    seq_lens = [600, 200, 130]          # packed varlen batch; crosses tile / segment boundaries
    total = sum(seq_lens)
    max_seqlen = max(seq_lens)

    key = jax.random.PRNGKey(0)
    kx, kp = jax.random.split(key)
    x = 0.2 * jax.random.normal(kx, (total, hid_dim), jnp.float32)
    cu_list = [0]
    for L in seq_lens:
        cu_list.append(cu_list[-1] + L)
    cu_seq_len = jnp.array(cu_list, dtype=jnp.int32)

    mod = MultiHeadAttentionVarLenPallas(hid_dim, n_heads, kp)
    out = jax.block_until_ready(mod(x, cu_seq_len, max_seqlen))

    ref = reference_forward(x, mod.w, mod.b, cu_list, n_heads, mod.scale)

    assert out.shape == (total, hid_dim), out.shape
    max_err = float(jnp.max(jnp.abs(out - ref)))
    assert jnp.allclose(out, ref, atol=2e-2, rtol=2e-2), f"mismatch vs reference, max_err={max_err}"
    print("KERNEL_OK")
</pallas_src>

<mosaic_0001>
module attributes {stable_mosaic.version = 11 : i64} {
  func.func @qkv_proj_kernel(%arg0: i32, %arg1: i32, %arg2: i32, %arg3: memref<512x256xf32, #tpu.memory_space<vmem>>, %arg4: memref<256x256xbf16, #tpu.memory_space<vmem>>, %arg5: memref<1x256xf32, #tpu.memory_space<vmem>>, %arg6: memref<512x256xbf16, #tpu.memory_space<vmem>>, %arg7: memref<512x256xf32, #tpu.memory_space<vmem>>) attributes {dimension_semantics = [#tpu.dimension_semantics<parallel>, #tpu.dimension_semantics<parallel>, #tpu.dimension_semantics<arbitrary>], iteration_bounds = array<i64: 2, 3, 1>, scalar_prefetch = 0 : i64, scratch_operands = 1 : i64, tpu.core_type = #tpu.core_type<tc>, window_params = [{transform_indices = @transform_0, window_bounds = array<i64: 512, 256>}, {transform_indices = @transform_1, window_bounds = array<i64: 256, 256>}, {transform_indices = @transform_2, window_bounds = array<i64: 1, 256>}, {transform_indices = @transform_3, window_bounds = array<i64: 512, 256>}]} {
    %c0_i32 = arith.constant 0 : i32
    %0 = arith.cmpi eq, %arg2, %c0_i32 : i32
    %1 = arith.extui %0 : i1 to i32
    %c0_i32_0 = arith.constant 0 : i32
    %2 = arith.cmpi ne, %1, %c0_i32_0 : i32
    scf.if %2 {
      %cst_10 = arith.constant 0.000000e+00 : f32
      %13 = vector.broadcast %cst_10 : f32 to vector<512x256xf32>
      %c0_11 = arith.constant 0 : index
      %c0_12 = arith.constant 0 : index
      %14 = vector.load %arg7[%c0_11, %c0_12] : memref<512x256xf32, #tpu.memory_space<vmem>>, vector<512x256xf32>
      tpu.vector_store %arg7[%c0_11, %c0_12], %13 {strides = array<i32>} : memref<512x256xf32, #tpu.memory_space<vmem>>, vector<512x256xf32>,
    } else {
    }
    %c0 = arith.constant 0 : index
    %c0_1 = arith.constant 0 : index
    %3 = vector.load %arg7[%c0, %c0_1] : memref<512x256xf32, #tpu.memory_space<vmem>>, vector<512x256xf32>
    %c0_2 = arith.constant 0 : index
    %c0_3 = arith.constant 0 : index
    %4 = vector.load %arg3[%c0_2, %c0_3] : memref<512x256xf32, #tpu.memory_space<vmem>>, vector<512x256xf32>
    %5 = arith.truncf %4 : vector<512x256xf32> to vector<512x256xbf16>
    %c0_4 = arith.constant 0 : index
    %c0_5 = arith.constant 0 : index
    %6 = vector.load %arg4[%c0_4, %c0_5] : memref<256x256xbf16, #tpu.memory_space<vmem>>, vector<256x256xbf16>
    %cst = arith.constant dense<0.000000e+00> : vector<512x256xf32>
    %7 = tpu.matmul %5, %6, %cst {dimension_numbers = #tpu.dot_dimension_numbers<[1], [0], [0], [1], [0, 0, 1, 1], [], []>} : vector<512x256xbf16>, vector<256x256xbf16>, vector<512x256xf32> -> vector<512x256xf32>
    %8 = arith.addf %3, %7 : vector<512x256xf32>
    %c0_6 = arith.constant 0 : index
    %c0_7 = arith.constant 0 : index
    %9 = vector.load %arg7[%c0_6, %c0_7] : memref<512x256xf32, #tpu.memory_space<vmem>>, vector<512x256xf32>
    tpu.vector_store %arg7[%c0_6, %c0_7], %8 {strides = array<i32>} : memref<512x256xf32, #tpu.memory_space<vmem>>, vector<512x256xf32>,
    %c0_i32_8 = arith.constant 0 : i32
    %10 = arith.cmpi eq, %arg2, %c0_i32_8 : i32
    %11 = arith.extui %10 : i1 to i32
    %c0_i32_9 = arith.constant 0 : i32
    %12 = arith.cmpi ne, %11, %c0_i32_9 : i32
    scf.if %12 {
      %c0_10 = arith.constant 0 : index
      %c0_11 = arith.constant 0 : index
      %13 = vector.load %arg7[%c0_10, %c0_11] : memref<512x256xf32, #tpu.memory_space<vmem>>, vector<512x256xf32>
      %c0_12 = arith.constant 0 : index
      %c0_13 = arith.constant 0 : index
      %14 = vector.load %arg5[%c0_12, %c0_13] : memref<1x256xf32, #tpu.memory_space<vmem>>, vector<1x256xf32>
      %15 = vector.broadcast %14 : vector<1x256xf32> to vector<512x256xf32>
      %16 = arith.addf %13, %15 : vector<512x256xf32>
      %17 = arith.truncf %16 : vector<512x256xf32> to vector<512x256xbf16>
      %c0_14 = arith.constant 0 : index
      %c0_15 = arith.constant 0 : index
      %18 = vector.load %arg6[%c0_14, %c0_15] : memref<512x256xbf16, #tpu.memory_space<vmem>>, vector<512x256xbf16>
      tpu.vector_store %arg6[%c0_14, %c0_15], %17 {strides = array<i32>} : memref<512x256xbf16, #tpu.memory_space<vmem>>, vector<512x256xbf16>,
    } else {
    }
    return
  }
  func.func @transform_0(%arg0: i32, %arg1: i32, %arg2: i32) -> (i32, i32) {
    %c0_i32 = arith.constant 0 : i32
    return %arg0, %arg2 : i32, i32
  }
  func.func @transform_1(%arg0: i32, %arg1: i32, %arg2: i32) -> (i32, i32) {
    %c0_i32 = arith.constant 0 : i32
    return %arg2, %arg1 : i32, i32
  }
  func.func @transform_2(%arg0: i32, %arg1: i32, %arg2: i32) -> (i32, i32) {
    %c0_i32 = arith.constant 0 : i32
    %c0_i32_0 = arith.constant 0 : i32
    return %c0_i32, %arg1 : i32, i32
  }
  func.func @transform_3(%arg0: i32, %arg1: i32, %arg2: i32) -> (i32, i32) {
    %c0_i32 = arith.constant 0 : i32
    return %arg0, %arg1 : i32, i32
  }
}

</mosaic_0001>

<llo_original>
// kernel: tpu_custom_call.1
$region0: #{tpu_custom_call.1}
  #allocation0 [shape = 'u32[]', space=smem, size = 0x4, offset = 0x4, fixed_abs, tag = 'smem constant byte address 0x4 - core index']
  #allocation1 [shape = 'u32[144,128]{1,0:T(1,128)}', space=vmem, size = 0x12000, scoped, tag = 'internal scratch']
  #allocation2 [shape = 'f32[512,256]{1,0:T(8,128)}', space=vmem, size = 0x80000, scoped, tag = 'scratch operand']
  %s0 = inlined_call_operand.hbm [shape: f32[1024,256], index: 0, kind: input, shape index: {}]
  %s1 = inlined_call_operand.hbm [shape: bf16[256,768], index: 1, kind: input, shape index: {}]
  %s2 = inlined_call_operand.hbm [shape: f32[1,768], index: 2, kind: input, shape index: {}]
  %s3 = inlined_call_operand.hbm [shape: bf16[1024,768], index: 3, kind: output, shape index: {}]
  %s4 = sld [smem:[#allocation0]]
  $region65: #{tpu_custom_call.1} parent=0
    _
  %s6 = ssub.s32 1, %s4
  %s7 = scalar_select 0, %s6, %s4
  $region1: #{tpu_custom_call.1} parent=0
    #allocation3 [shape = 'u8[1048576]{0}', space=vmem, size = 0x100000, scoped, tag = 'input window, operand 0']
    #allocation4 [shape = 's32[2]{0}', space=sflag, size = 0x8, scoped, tag = 'scoped memory for tpu_custom_call.1']
    #allocation5 [shape = 's32[2]{0}', space=sflag, size = 0x8, scoped, tag = 'scoped memory for tpu_custom_call.1']
    #allocation6 [shape = 'u8[262144]{0}', space=vmem, size = 0x40000, scoped, tag = 'input window, operand 1']
    #allocation7 [shape = 's32[2]{0}', space=sflag, size = 0x8, scoped, tag = 'scoped memory for tpu_custom_call.1']
    #allocation8 [shape = 'u8[2048]{0}', space=vmem, size = 0x800, scoped, tag = 'input window, operand 2']
    #allocation9 [shape = 'u8[524288]{0}', space=vmem, size = 0x80000, scoped, tag = 'output window, operand 0']
    %8 = vsyncpa [#allocation4], 0
    %s9 = scalar_lea.sflag [#allocation4], 1
    %10 = vsyncpa %s9, 0
    %11 = vsyncpa [#allocation7], 0
    %s12 = scalar_lea.sflag [#allocation7], 1
    %13 = vsyncpa %s12, 0
    %14 = vsyncpa [#allocation5], 0
    %s15 = scalar_lea.sflag [#allocation5], 1
    %16 = vsyncpa %s15, 0
    loop: start=0, step=1, limit=8
    $region2: #{tpu_custom_call.1} parent=1 // loop_pre_header
      _
    $region3: #{tpu_custom_call.1} parent=1 // loop_header
      %s18 = sphi 0, %s22
      %p19 = scmp.ge.s32.totalorder %s18, 8
      %s25 = sphi 0, %s44
      %s26 = sphi 0, %s40
      %s27 = sphi 0, %s36
      %s28 = sphi 0, %s25
      %s29 = sphi 0, %s26
      %s30 = sphi 0, %s27
      %s31 = sphi 0, %s28
      %s32 = sphi 0, %s29
      %s33 = sphi 0, %s30
      %s49 = sphi 0, %s51
      %s52 = sphi 0, %s49
      %s53 = sphi 0, %s52
      %s69 = sphi 0, %s53
      %s77 = sphi 0, %s79
      %s80 = sphi 0, %s77
      %s81 = sphi 0, %s80
      %s97 = sphi 0, %s81
      %s103 = sphi 0, %s105
      %s106 = sphi 0, %s103
      %s107 = sphi 0, %s106
      %s123 = sphi 0, %s107
      %s131 = sphi 0, %s133
      %s134 = sphi 0, %s131
      %s135 = sphi 0, %s134
      %s151 = sphi 0, %s135
    $region4: #{tpu_custom_call.1} parent=1 // loop_header_branch
      %21 = sbr.rel (%p19) target = $region8
    $region5: #{tpu_custom_call.1} parent=1 // loop_body
      %s23 = ssub.s32 %s18, 1
      %s24 = ssub.s32 %s18, 2
      %s34 = sadd.s32 1, %s27
      %p35 = scmp.ge.s32.totalorder %s34, 1
      %s36 = scalar_select %p35, 0, %s34
      %s37 = sadd.s32 1, %s26
      %s38 = scalar_select %p35, %s37, %s26
      %p39 = scmp.ge.s32.totalorder %s38, 3
      %s40 = scalar_select %p39, 0, %s38
      %s41 = sadd.s32 1, %s25
      %s42 = scalar_select %p39, %s41, %s25
      %p43 = scmp.ge.s32.totalorder %s42, 2
      %s44 = scalar_select %p43, 0, %s42
      %s45 = ssub.s32 %s25, %s44
      %s46 = ssub.s32 %s27, %s36
      %s47 = sor.u32 %s45, %s46
      %p48 = scmp.eq.s32.totalorder %s47, 0
      %s50 = sadd.s32 %s49, 1
      %s51 = scalar_select %p48, %s49, %s50
      %p54 = pneg %p48
      %p55 = scmp.eq.s32.totalorder %s18, 5
      %p56 = por %p54, %p55
      %p57 = scmp.ne.s32.totalorder %s49, %s52
      %p58 = scmp.eq.s32.totalorder %s18, 0
      %p59 = por %p57, %p58
      %p60 = scmp.ne.s32.totalorder %s49, %s52
      %p61 = scmp.eq.s32.totalorder %s23, 5
      %p62 = por %p60, %p61
      %p63 = scmp.ne.s32.totalorder %s52, %s53
      %p64 = scmp.eq.s32.totalorder %s23, 0
      %p65 = por %p63, %p64
      %p66 = scmp.ne.s32.totalorder %s52, %s53
      %p67 = scmp.eq.s32.totalorder %s24, 5
      %p68 = por %p66, %p67
      %p70 = scmp.ne.s32.totalorder %s53, %s69
      %p71 = scmp.eq.s32.totalorder %s24, 0
      %p72 = por %p70, %p71
      %s73 = ssub.s32 %s27, %s36
      %s74 = ssub.s32 %s26, %s40
      %s75 = sor.u32 %s73, %s74
      %p76 = scmp.eq.s32.totalorder %s75, 0
      %s78 = sadd.s32 %s77, 1
      %s79 = scalar_select %p76, %s77, %s78
      %p82 = pneg %p76
      %p83 = scmp.eq.s32.totalorder %s18, 5
      %p84 = por %p82, %p83
      %p85 = scmp.ne.s32.totalorder %s77, %s80
      %p86 = scmp.eq.s32.totalorder %s18, 0
      %p87 = por %p85, %p86
      %p88 = scmp.ne.s32.totalorder %s77, %s80
      %p89 = scmp.eq.s32.totalorder %s23, 5
      %p90 = por %p88, %p89
      %p91 = scmp.ne.s32.totalorder %s80, %s81
      %p92 = scmp.eq.s32.totalorder %s23, 0
      %p93 = por %p91, %p92
      %p94 = scmp.ne.s32.totalorder %s80, %s81
      %p95 = scmp.eq.s32.totalorder %s24, 5
      %p96 = por %p94, %p95
      %p98 = scmp.ne.s32.totalorder %s81, %s97
      %p99 = scmp.eq.s32.totalorder %s24, 0
      %p100 = por %p98, %p99
      %s101 = ssub.s32 %s26, %s40
      %p102 = scmp.eq.s32.totalorder %s101, 0
      %s104 = sadd.s32 %s103, 1
      %s105 = scalar_select %p102, %s103, %s104
      %p108 = pneg %p102
      %p109 = scmp.eq.s32.totalorder %s18, 5
      %p110 = por %p108, %p109
      %p111 = scmp.ne.s32.totalorder %s103, %s106
      %p112 = scmp.eq.s32.totalorder %s18, 0
      %p113 = por %p111, %p112
      %p114 = scmp.ne.s32.totalorder %s103, %s106
      %p115 = scmp.eq.s32.totalorder %s23, 5
      %p116 = por %p114, %p115
      %p117 = scmp.ne.s32.totalorder %s106, %s107
      %p118 = scmp.eq.s32.totalorder %s23, 0
      %p119 = por %p117, %p118
      %p120 = scmp.ne.s32.totalorder %s106, %s107
      %p121 = scmp.eq.s32.totalorder %s24, 5
      %p122 = por %p120, %p121
      %p124 = scmp.ne.s32.totalorder %s107, %s123
      %p125 = scmp.eq.s32.totalorder %s24, 0
      %p126 = por %p124, %p125
      %s127 = ssub.s32 %s25, %s44
      %s128 = ssub.s32 %s26, %s40
      %s129 = sor.u32 %s127, %s128
      %p130 = scmp.eq.s32.totalorder %s129, 0
      %s132 = sadd.s32 %s131, 1
      %s133 = scalar_select %p130, %s131, %s132
      %p136 = pneg %p130
      %p137 = scmp.eq.s32.totalorder %s18, 5
      %p138 = por %p136, %p137
      %p139 = scmp.ne.s32.totalorder %s131, %s134
      %p140 = scmp.eq.s32.totalorder %s18, 0
      %p141 = por %p139, %p140
      %p142 = scmp.ne.s32.totalorder %s131, %s134
      %p143 = scmp.eq.s32.totalorder %s23, 5
      %p144 = por %p142, %p143
      %p145 = scmp.ne.s32.totalorder %s134, %s135
      %p146 = scmp.eq.s32.totalorder %s23, 0
      %p147 = por %p145, %p146
      %p148 = scmp.ne.s32.totalorder %s134, %s135
      %p149 = scmp.eq.s32.totalorder %s24, 5
      %p150 = por %p148, %p149
      %p152 = scmp.ne.s32.totalorder %s135, %s151
      %p153 = scmp.eq.s32.totalorder %s24, 0
      %p154 = por %p152, %p153
      %p155 = scmp.le.s32.totalorder 1, %s18
      %p156 = scmp.lt.s32.totalorder %s18, 7
      %p157 = pnand %p155, %p156
      %p158 = pneg %p157
      // Predicated region
      $region9: #{tpu_custom_call.1} parent=5 // pred_check
        _
      $region10: #{tpu_custom_call.1} parent=5 // pred_check_branch
        %160 = sbr.rel (%p157) target = $region12
      $region11: #{tpu_custom_call.1} parent=5 // pred_region
        %s161 = ssub.s32 %s18, 1
      $region12: #{tpu_custom_call.1} parent=5 // pred_fallthru
        _
      %p162 = scmp.lt.s32.totalorder %s18, 6
      // Predicated region
      $region13: #{tpu_custom_call.1} parent=5 // pred_check
        %p163 = pneg %p162
      $region14: #{tpu_custom_call.1} parent=5 // pred_check_branch
        %165 = sbr.rel (%p163) target = $region16
      $region15: #{tpu_custom_call.1} parent=5 // pred_region
        // Predicated region
        $region17: #{tpu_custom_call.1} parent=15 // pred_check
          %p166 = pneg %p59
        $region18: #{tpu_custom_call.1} parent=15 // pred_check_branch
          %168 = sbr.rel (%p166) target = $region20
        $region19: #{tpu_custom_call.1} parent=15 // pred_region
          %s169 = sand.u32 %s49, 1
          %s170 = scalar_lea.sflag [#allocation4], %s169
          %s171 = sand.u32 %s49, 1
          %s172 = smul.addr %s171, 1024
          %s173 = scalar_lea.vmem [#allocation3], %s172
          %s174 = smul.u32 64, %s25
          %s175 = smul.u32 2, %s27
          %s177 = ssub.s32 16384, 16384
          %178 = vsyncadd %s170, %s177
          %s179 = smul.addr %s174, 2
          %s180 = sadd.s32 %s175, %s179
          %s181 = smul.addr %s180, 128
          %s182 = scalar_lea.hbm %s0, %s181
          %s183 = sshll.u32 %s173, 4
          %s184 = int_to_ptr.vmem [resolvable:$true] %s183
          %189 = dma.hbm_to_vmem [thread:$0]  %s182, 16384, %s184, %s170, 256, 256, 16
        $region20: #{tpu_custom_call.1} parent=15 // pred_fallthru
          _
        // Predicated region
        $region21: #{tpu_custom_call.1} parent=15 // pred_check
          %p190 = pneg %p87
        $region22: #{tpu_custom_call.1} parent=15 // pred_check_branch
          %192 = sbr.rel (%p190) target = $region24
        $region23: #{tpu_custom_call.1} parent=15 // pred_region
          %s193 = sand.u32 %s18, 1
          %s194 = scalar_lea.sflag [#allocation7], %s193
          %s195 = sand.u32 %s77, 1
          %s196 = smul.addr %s195, 256
          %s197 = scalar_lea.vmem [#allocation6], %s196
          %s198 = smul.u32 32, %s27
          %s199 = smul.u32 2, %s26
          %s201 = ssub.s32 4096, 4096
          %202 = vsyncadd %s194, %s201
          %s203 = smul.addr %s198, 6
          %s204 = sadd.s32 %s199, %s203
          %s205 = smul.addr %s204, 64
          %s206 = scalar_lea.hbm %s1, %s205
          %s207 = sshll.u32 %s197, 4
          %s208 = int_to_ptr.vmem [resolvable:$true] %s207
          %213 = dma.hbm_to_vmem [thread:$0]  %s206, 4096, %s208, %s194, 384, 128, 8
        $region24: #{tpu_custom_call.1} parent=15 // pred_fallthru
          _
        // Predicated region
        $region25: #{tpu_custom_call.1} parent=15 // pred_check
          %p214 = pneg %p113
        $region26: #{tpu_custom_call.1} parent=15 // pred_check_branch
          %216 = sbr.rel (%p214) target = $region28
        $region27: #{tpu_custom_call.1} parent=15 // pred_region
          %s217 = sand.u32 %s18, 1
          %s218 = scalar_lea.sflag [#allocation7], %s217
          %s219 = sand.u32 %s103, 1
          %s220 = smul.addr %s219, 2
          %s221 = scalar_lea.vmem [#allocation8], %s220
          %s222 = smul.u32 2, %s26
          %s224 = ssub.s32 32, 32
          %225 = vsyncadd %s218, %s224
          %s226 = smul.addr %s222, 16
          %s227 = scalar_lea.hbm %s2, %s226
          %s229 = sshll.u32 %s221, 4
          %s230 = int_to_ptr.vmem [resolvable:$true] %s229
          %232 = dma.hbm_to_vmem [thread:$0]  %s227, 32, %s230, %s218
        $region28: #{tpu_custom_call.1} parent=15 // pred_fallthru
          _
      $region16: #{tpu_custom_call.1} parent=5 // pred_fallthru
        _
      %p233 = scmp.le.s32.totalorder 1, %s18
      %p234 = scmp.lt.s32.totalorder %s18, 7
      %p235 = pnand %p233, %p234
      %p236 = pneg %p235
      // Predicated region
      $region29: #{tpu_custom_call.1} parent=5 // pred_check
        _
      $region30: #{tpu_custom_call.1} parent=5 // pred_check_branch
        %238 = sbr.rel (%p235) target = $region32
      $region31: #{tpu_custom_call.1} parent=5 // pred_region
        %s239 = ssub.s32 %s18, 1
        %s240 = sand.u32 %s52, 1
        %s241 = scalar_lea.sflag [#allocation4], %s240
        %s242 = sand.u32 %s52, 1
        %s243 = smul.addr %s242, 1024
        %s244 = scalar_lea.vmem [#allocation3], %s243
        // Predicated region
        $region33: #{tpu_custom_call.1} parent=31 // pred_check
          %p245 = pneg %p65
        $region34: #{tpu_custom_call.1} parent=31 // pred_check_branch
          %247 = sbr.rel (%p245) target = $region36
        $region35: #{tpu_custom_call.1} parent=31 // pred_region
          %248 = dma.done %s241, 16384
        $region36: #{tpu_custom_call.1} parent=31 // pred_fallthru
          _
        %s249 = sand.u32 %s23, 1
        %s250 = scalar_lea.sflag [#allocation7], %s249
        %s251 = sand.u32 %s80, 1
        %s252 = smul.addr %s251, 256
        %s253 = scalar_lea.vmem [#allocation6], %s252
        // Predicated region
        $region37: #{tpu_custom_call.1} parent=31 // pred_check
          %p254 = pneg %p93
        $region38: #{tpu_custom_call.1} parent=31 // pred_check_branch
          %256 = sbr.rel (%p254) target = $region40
        $region39: #{tpu_custom_call.1} parent=31 // pred_region
          %257 = dma.done %s250, 4096
        $region40: #{tpu_custom_call.1} parent=31 // pred_fallthru
          _
        %s258 = sand.u32 %s23, 1
        %s259 = scalar_lea.sflag [#allocation7], %s258
        %s260 = sand.u32 %s106, 1
        %s261 = smul.addr %s260, 2
        %s262 = scalar_lea.vmem [#allocation8], %s261
        // Predicated region
        $region41: #{tpu_custom_call.1} parent=31 // pred_check
          %p263 = pneg %p119
        $region42: #{tpu_custom_call.1} parent=31 // pred_check_branch
          %265 = sbr.rel (%p263) target = $region44
        $region43: #{tpu_custom_call.1} parent=31 // pred_region
          %266 = dma.done %s259, 32
        $region44: #{tpu_custom_call.1} parent=31 // pred_fallthru
          _
        %s267 = sand.u32 %s52, 1
        %s268 = scalar_lea.sflag [#allocation4], %s267
        %s269 = sand.u32 %s52, 1
        %s270 = smul.addr %s269, 1024
        %s271 = scalar_lea.vmem [#allocation3], %s270
        %p272 = pneg %p65
        %p273 = pneg %p62
        %s274 = sand.u32 %s23, 1
        %s275 = scalar_lea.sflag [#allocation7], %s274
        %s276 = sand.u32 %s80, 1
        %s277 = smul.addr %s276, 256
        %s278 = scalar_lea.vmem [#allocation6], %s277
        %p279 = pneg %p93
        %p280 = pneg %p90
        %s281 = sand.u32 %s23, 1
        %s282 = scalar_lea.sflag [#allocation7], %s281
        %s283 = sand.u32 %s106, 1
        %s284 = smul.addr %s283, 2
        %s285 = scalar_lea.vmem [#allocation8], %s284
        %p286 = pneg %p119
        %p287 = pneg %p116
        %p288 = pneg %p147
        %p289 = pneg %p144
        %s290 = sand.u32 %s134, 1
        %s291 = scalar_lea.sflag [#allocation5], %s290
        %s292 = sand.u32 %s134, 1
        %s293 = smul.addr %s292, 512
        %s294 = scalar_lea.vmem [#allocation9], %s293
        %s295 = smul.u32 64, %s28
        %s296 = smul.u32 2, %s30
        %s297 = smul.u32 32, %s30
        %s298 = smul.u32 2, %s29
        %s299 = smul.u32 2, %s29
        %s300 = smul.u32 64, %s28
        %s301 = smul.u32 2, %s29
        %p302 = scmp.eq.s32.totalorder %s30, 0
        // Predicated region
        $region45: #{tpu_custom_call.1} parent=31 // pred_check
          %p303 = pneg %p302
        $region46: #{tpu_custom_call.1} parent=31 // pred_check_branch
          %305 = sbr.rel (%p303) target = $region48
        $region47: #{tpu_custom_call.1} parent=31 // pred_region
          %306 = vst [vmem:[#allocation2] sm:$0xff] 0.0
          %307 = vst [vmem:[#allocation2 + $0x8] sm:$0xff] 0.0
          %308 = vst [vmem:[#allocation2 + $0x10] sm:$0xff] 0.0
          %309 = vst [vmem:[#allocation2 + $0x18] sm:$0xff] 0.0
          %310 = vst [vmem:[#allocation2 + $0x20] sm:$0xff] 0.0
          %311 = vst [vmem:[#allocation2 + $0x28] sm:$0xff] 0.0
          %312 = vst [vmem:[#allocation2 + $0x30] sm:$0xff] 0.0
          %313 = vst [vmem:[#allocation2 + $0x38] sm:$0xff] 0.0
          %314 = vst [vmem:[#allocation2 + $0x40] sm:$0xff] 0.0
          %315 = vst [vmem:[#allocation2 + $0x48] sm:$0xff] 0.0
          %316 = vst [vmem:[#allocation2 + $0x50] sm:$0xff] 0.0
          %317 = vst [vmem:[#allocation2 + $0x58] sm:$0xff] 0.0
          %318 = vst [vmem:[#allocation2 + $0x60] sm:$0xff] 0.0
          %319 = vst [vmem:[#allocation2 + $0x68] sm:$0xff] 0.0
          %320 = vst [vmem:[#allocation2 + $0x70] sm:$0xff] 0.0
          %321 = vst [vmem:[#allocation2 + $0x78] sm:$0xff] 0.0
          %322 = vst [vmem:[#allocation2 + $0x80] sm:$0xff] 0.0
          %323 = vst [vmem:[#allocation2 + $0x88] sm:$0xff] 0.0
          %324 = vst [vmem:[#allocation2 + $0x90] sm:$0xff] 0.0
          %325 = vst [vmem:[#allocation2 + $0x98] sm:$0xff] 0.0
          %326 = vst [vmem:[#allocation2 + $0xa0] sm:$0xff] 0.0
          %327 = vst [vmem:[#allocation2 + $0xa8] sm:$0xff] 0.0
          %328 = vst [vmem:[#allocation2 + $0xb0] sm:$0xff] 0.0
          %329 = vst [vmem:[#allocation2 + $0xb8] sm:$0xff] 0.0
          %330 = vst [vmem:[#allocation2 + $0xc0] sm:$0xff] 0.0
          %331 = vst [vmem:[#allocation2 + $0xc8] sm:$0xff] 0.0
          %332 = vst [vmem:[#allocation2 + $0xd0] sm:$0xff] 0.0
          %333 = vst [vmem:[#allocation2 + $0xd8] sm:$0xff] 0.0
          %334 = vst [vmem:[#allocation2 + $0xe0] sm:$0xff] 0.0
          %335 = vst [vmem:[#allocation2 + $0xe8] sm:$0xff] 0.0
          %336 = vst [vmem:[#allocation2 + $0xf0] sm:$0xff] 0.0
          %337 = vst [vmem:[#allocation2 + $0xf8] sm:$0xff] 0.0
          %338 = vst [vmem:[#allocation2 + $0x100] sm:$0xff] 0.0
          %339 = vst [vmem:[#allocation2 + $0x108] sm:$0xff] 0.0
          %340 = vst [vmem:[#allocation2 + $0x110] sm:$0xff] 0.0
          %341 = vst [vmem:[#allocation2 + $0x118] sm:$0xff] 0.0
          %342 = vst [vmem:[#allocation2 + $0x120] sm:$0xff] 0.0
          %343 = vst [vmem:[#allocation2 + $0x128] sm:$0xff] 0.0
          %344 = vst [vmem:[#allocation2 + $0x130] sm:$0xff] 0.0
          %345 = vst [vmem:[#allocation2 + $0x138] sm:$0xff] 0.0
          %346 = vst [vmem:[#allocation2 + $0x140] sm:$0xff] 0.0
          %347 = vst [vmem:[#allocation2 + $0x148] sm:$0xff] 0.0
          %348 = vst [vmem:[#allocation2 + $0x150] sm:$0xff] 0.0
          %349 = vst [vmem:[#allocation2 + $0x158] sm:$0xff] 0.0
          %350 = vst [vmem:[#allocation2 + $0x160] sm:$0xff] 0.0
          %351 = vst [vmem:[#allocation2 + $0x168] sm:$0xff] 0.0
          %352 = vst [vmem:[#allocation2 + $0x170] sm:$0xff] 0.0
          %353 = vst [vmem:[#allocation2 + $0x178] sm:$0xff] 0.0
          %354 = vst [vmem:[#allocation2 + $0x180] sm:$0xff] 0.0
          %355 = vst [vmem:[#allocation2 + $0x188] sm:$0xff] 0.0
          %356 = vst [vmem:[#allocation2 + $0x190] sm:$0xff] 0.0
          %357 = vst [vmem:[#allocation2 + $0x198] sm:$0xff] 0.0
          %358 = vst [vmem:[#allocation2 + $0x1a0] sm:$0xff] 0.0
          %359 = vst [vmem:[#allocation2 + $0x1a8] sm:$0xff] 0.0
          %360 = vst [vmem:[#allocation2 + $0x1b0] sm:$0xff] 0.0
          %361 = vst [vmem:[#allocation2 + $0x1b8] sm:$0xff] 0.0
          %362 = vst [vmem:[#allocation2 + $0x1c0] sm:$0xff] 0.0
          %363 = vst [vmem:[#allocation2 + $0x1c8] sm:$0xff] 0.0
          %364 = vst [vmem:[#allocation2 + $0x1d0] sm:$0xff] 0.0
          %365 = vst [vmem:[#allocation2 + $0x1d8] sm:$0xff] 0.0
          %366 = vst [vmem:[#allocation2 + $0x1e0] sm:$0xff] 0.0
          %367 = vst [vmem:[#allocation2 + $0x1e8] sm:$0xff] 0.0
          %368 = vst [vmem:[#allocation2 + $0x1f0] sm:$0xff] 0.0
          %369 = vst [vmem:[#allocation2 + $0x1f8] sm:$0xff] 0.0
          %370 = vst [vmem:[#allocation2 + $0x200] sm:$0xff] 0.0
          %371 = vst [vmem:[#allocation2 + $0x208] sm:$0xff] 0.0
          %372 = vst [vmem:[#allocation2 + $0x210] sm:$0xff] 0.0
          %373 = vst [vmem:[#allocation2 + $0x218] sm:$0xff] 0.0
          %374 = vst [vmem:[#allocation2 + $0x220] sm:$0xff] 0.0
          %375 = vst [vmem:[#allocation2 + $0x228] sm:$0xff] 0.0
          %376 = vst [vmem:[#allocation2 + $0x230] sm:$0xff] 0.0
          %377 = vst [vmem:[#allocation2 + $0x238] sm:$0xff] 0.0
          %378 = vst [vmem:[#allocation2 + $0x240] sm:$0xff] 0.0
          %379 = vst [vmem:[#allocation2 + $0x248] sm:$0xff] 0.0
          %380 = vst [vmem:[#allocation2 + $0x250] sm:$0xff] 0.0
          %381 = vst [vmem:[#allocation2 + $0x258] sm:$0xff] 0.0
          %382 = vst [vmem:[#allocation2 + $0x260] sm:$0xff] 0.0
          %383 = vst [vmem:[#allocation2 + $0x268] sm:$0xff] 0.0
          %384 = vst [vmem:[#allocation2 + $0x270] sm:$0xff] 0.0
          %385 = vst [vmem:[#allocation2 + $0x278] sm:$0xff] 0.0
          %386 = vst [vmem:[#allocation2 + $0x280] sm:$0xff] 0.0
          %387 = vst [vmem:[#allocation2 + $0x288] sm:$0xff] 0.0
          %388 = vst [vmem:[#allocation2 + $0x290] sm:$0xff] 0.0
          %389 = vst [vmem:[#allocation2 + $0x298] sm:$0xff] 0.0
          %390 = vst [vmem:[#allocation2 + $0x2a0] sm:$0xff] 0.0
          %391 = vst [vmem:[#allocation2 + $0x2a8] sm:$0xff] 0.0
          %392 = vst [vmem:[#allocation2 + $0x2b0] sm:$0xff] 0.0
          %393 = vst [vmem:[#allocation2 + $0x2b8] sm:$0xff] 0.0
          %394 = vst [vmem:[#allocation2 + $0x2c0] sm:$0xff] 0.0
          %395 = vst [vmem:[#allocation2 + $0x2c8] sm:$0xff] 0.0
          %396 = vst [vmem:[#allocation2 + $0x2d0] sm:$0xff] 0.0
          %397 = vst [vmem:[#allocation2 + $0x2d8] sm:$0xff] 0.0
          %398 = vst [vmem:[#allocation2 + $0x2e0] sm:$0xff] 0.0
          %399 = vst [vmem:[#allocation2 + $0x2e8] sm:$0xff] 0.0
          %400 = vst [vmem:[#allocation2 + $0x2f0] sm:$0xff] 0.0
          %401 = vst [vmem:[#allocation2 + $0x2f8] sm:$0xff] 0.0
          %402 = vst [vmem:[#allocation2 + $0x300] sm:$0xff] 0.0
          %403 = vst [vmem:[#allocation2 + $0x308] sm:$0xff] 0.0
          %404 = vst [vmem:[#allocation2 + $0x310] sm:$0xff] 0.0
          %405 = vst [vmem:[#allocation2 + $0x318] sm:$0xff] 0.0
          %406 = vst [vmem:[#allocation2 + $0x320] sm:$0xff] 0.0
          %407 = vst [vmem:[#allocation2 + $0x328] sm:$0xff] 0.0
          %408 = vst [vmem:[#allocation2 + $0x330] sm:$0xff] 0.0
          %409 = vst [vmem:[#allocation2 + $0x338] sm:$0xff] 0.0
          %410 = vst [vmem:[#allocation2 + $0x340] sm:$0xff] 0.0
          %411 = vst [vmem:[#allocation2 + $0x348] sm:$0xff] 0.0
          %412 = vst [vmem:[#allocation2 + $0x350] sm:$0xff] 0.0
          %413 = vst [vmem:[#allocation2 + $0x358] sm:$0xff] 0.0
          %414 = vst [vmem:[#allocation2 + $0x360] sm:$0xff] 0.0
          %415 = vst [vmem:[#allocation2 + $0x368] sm:$0xff] 0.0
          %416 = vst [vmem:[#allocation2 + $0x370] sm:$0xff] 0.0
          %417 = vst [vmem:[#allocation2 + $0x378] sm:$0xff] 0.0
          %418 = vst [vmem:[#allocation2 + $0x380] sm:$0xff] 0.0
          %419 = vst [vmem:[#allocation2 + $0x388] sm:$0xff] 0.0
          %420 = vst [vmem:[#allocation2 + $0x390] sm:$0xff] 0.0
          %421 = vst [vmem:[#allocation2 + $0x398] sm:$0xff] 0.0
          %422 = vst [vmem:[#allocation2 + $0x3a0] sm:$0xff] 0.0
          %423 = vst [vmem:[#allocation2 + $0x3a8] sm:$0xff] 0.0
          %424 = vst [vmem:[#allocation2 + $0x3b0] sm:$0xff] 0.0
          %425 = vst [vmem:[#allocation2 + $0x3b8] sm:$0xff] 0.0
          %426 = vst [vmem:[#allocation2 + $0x3c0] sm:$0xff] 0.0
          %427 = vst [vmem:[#allocation2 + $0x3c8] sm:$0xff] 0.0
          %428 = vst [vmem:[#allocation2 + $0x3d0] sm:$0xff] 0.0
          %429 = vst [vmem:[#allocation2 + $0x3d8] sm:$0xff] 0.0
          %430 = vst [vmem:[#allocation2 + $0x3e0] sm:$0xff] 0.0
          %431 = vst [vmem:[#allocation2 + $0x3e8] sm:$0xff] 0.0
          %432 = vst [vmem:[#allocation2 + $0x3f0] sm:$0xff] 0.0
          %433 = vst [vmem:[#allocation2 + $0x3f8] sm:$0xff] 0.0
        $region48: #{tpu_custom_call.1} parent=31 // pred_fallthru
          _
        %v434 = vld [vmem:[#allocation2] sm:$0xff]
        %v435 = vld [vmem:[#allocation2 + $0x8] sm:$0xff]
        %v436 = vld [vmem:[#allocation2 + $0x10] sm:$0xff]
        %v437 = vld [vmem:[#allocation2 + $0x18] sm:$0xff]
        %v438 = vld [vmem:[#allocation2 + $0x20] sm:$0xff]
        %v439 = vld [vmem:[#allocation2 + $0x28] sm:$0xff]
        %v440 = vld [vmem:[#allocation2 + $0x30] sm:$0xff]
        %v441 = vld [vmem:[#allocation2 + $0x38] sm:$0xff]
        %v442 = vld [vmem:[#allocation2 + $0x40] sm:$0xff]
        %v443 = vld [vmem:[#allocation2 + $0x48] sm:$0xff]
        %v444 = vld [vmem:[#allocation2 + $0x50] sm:$0xff]
        %v445 = vld [vmem:[#allocation2 + $0x58] sm:$0xff]
        %v446 = vld [vmem:[#allocation2 + $0x60] sm:$0xff]
        %v447 = vld [vmem:[#allocation2 + $0x68] sm:$0xff]
        %v448 = vld [vmem:[#allocation2 + $0x70] sm:$0xff]
        %v449 = vld [vmem:[#allocation2 + $0x78] sm:$0xff]
        %v450 = vld [vmem:[#allocation2 + $0x80] sm:$0xff]
        %v451 = vld [vmem:[#allocation2 + $0x88] sm:$0xff]
        %v452 = vld [vmem:[#allocation2 + $0x90] sm:$0xff]
        %v453 = vld [vmem:[#allocation2 + $0x98] sm:$0xff]
        %v454 = vld [vmem:[#allocation2 + $0xa0] sm:$0xff]
        %v455 = vld [vmem:[#allocation2 + $0xa8] sm:$0xff]
        %v456 = vld [vmem:[#allocation2 + $0xb0] sm:$0xff]
        %v457 = vld [vmem:[#allocation2 + $0xb8] sm:$0xff]
        %v458 = vld [vmem:[#allocation2 + $0xc0] sm:$0xff]
        %v459 = vld [vmem:[#allocation2 + $0xc8] sm:$0xff]
        %v460 = vld [vmem:[#allocation2 + $0xd0] sm:$0xff]
        %v461 = vld [vmem:[#allocation2 + $0xd8] sm:$0xff]
        %v462 = vld [vmem:[#allocation2 + $0xe0] sm:$0xff]
        %v463 = vld [vmem:[#allocation2 + $0xe8] sm:$0xff]
        %v464 = vld [vmem:[#allocation2 + $0xf0] sm:$0xff]
        %v465 = vld [vmem:[#allocation2 + $0xf8] sm:$0xff]
        %v466 = vld [vmem:[#allocation2 + $0x100] sm:$0xff]
        %v467 = vld [vmem:[#allocation2 + $0x108] sm:$0xff]
        %v468 = vld [vmem:[#allocation2 + $0x110] sm:$0xff]
        %v469 = vld [vmem:[#allocation2 + $0x118] sm:$0xff]
        %v470 = vld [vmem:[#allocation2 + $0x120] sm:$0xff]
        %v471 = vld [vmem:[#allocation2 + $0x128] sm:$0xff]
        %v472 = vld [vmem:[#allocation2 + $0x130] sm:$0xff]
        %v473 = vld [vmem:[#allocation2 + $0x138] sm:$0xff]
        %v474 = vld [vmem:[#allocation2 + $0x140] sm:$0xff]
        %v475 = vld [vmem:[#allocation2 + $0x148] sm:$0xff]
        %v476 = vld [vmem:[#allocation2 + $0x150] sm:$0xff]
        %v477 = vld [vmem:[#allocation2 + $0x158] sm:$0xff]
        %v478 = vld [vmem:[#allocation2 + $0x160] sm:$0xff]
        %v479 = vld [vmem:[#allocation2 + $0x168] sm:$0xff]
        %v480 = vld [vmem:[#allocation2 + $0x170] sm:$0xff]
        %v481 = vld [vmem:[#allocation2 + $0x178] sm:$0xff]
        %v482 = vld [vmem:[#allocation2 + $0x180] sm:$0xff]
        %v483 = vld [vmem:[#allocation2 + $0x188] sm:$0xff]
        %v484 = vld [vmem:[#allocation2 + $0x190] sm:$0xff]
        %v485 = vld [vmem:[#allocation2 + $0x198] sm:$0xff]
        %v486 = vld [vmem:[#allocation2 + $0x1a0] sm:$0xff]
        %v487 = vld [vmem:[#allocation2 + $0x1a8] sm:$0xff]
        %v488 = vld [vmem:[#allocation2 + $0x1b0] sm:$0xff]
        %v489 = vld [vmem:[#allocation2 + $0x1b8] sm:$0xff]
        %v490 = vld [vmem:[#allocation2 + $0x1c0] sm:$0xff]
        %v491 = vld [vmem:[#allocation2 + $0x1c8] sm:$0xff]
        %v492 = vld [vmem:[#allocation2 + $0x1d0] sm:$0xff]
        %v493 = vld [vmem:[#allocation2 + $0x1d8] sm:$0xff]
        %v494 = vld [vmem:[#allocation2 + $0x1e0] sm:$0xff]
        %v495 = vld [vmem:[#allocation2 + $0x1e8] sm:$0xff]
        %v496 = vld [vmem:[#allocation2 + $0x1f0] sm:$0xff]
        %v497 = vld [vmem:[#allocation2 + $0x1f8] sm:$0xff]
        %v498 = vld [vmem:[#allocation2 + $0x200] sm:$0xff]
        %v499 = vld [vmem:[#allocation2 + $0x208] sm:$0xff]
        %v500 = vld [vmem:[#allocation2 + $0x210] sm:$0xff]
        %v501 = vld [vmem:[#allocation2 + $0x218] sm:$0xff]
        %v502 = vld [vmem:[#allocation2 + $0x220] sm:$0xff]
        %v503 = vld [vmem:[#allocation2 + $0x228] sm:$0xff]
        %v504 = vld [vmem:[#allocation2 + $0x230] sm:$0xff]
        %v505 = vld [vmem:[#allocation2 + $0x238] sm:$0xff]
        %v506 = vld [vmem:[#allocation2 + $0x240] sm:$0xff]
        %v507 = vld [vmem:[#allocation2 + $0x248] sm:$0xff]
        %v508 = vld [vmem:[#allocation2 + $0x250] sm:$0xff]
        %v509 = vld [vmem:[#allocation2 + $0x258] sm:$0xff]
        %v510 = vld [vmem:[#allocation2 + $0x260] sm:$0xff]
        %v511 = vld [vmem:[#allocation2 + $0x268] sm:$0xff]
        %v512 = vld [vmem:[#allocation2 + $0x270] sm:$0xff]
        %v513 = vld [vmem:[#allocation2 + $0x278] sm:$0xff]
        %v514 = vld [vmem:[#allocation2 + $0x280] sm:$0xff]
        %v515 = vld [vmem:[#allocation2 + $0x288] sm:$0xff]
        %v516 = vld [vmem:[#allocation2 + $0x290] sm:$0xff]
        %v517 = vld [vmem:[#allocation2 + $0x298] sm:$0xff]
        %v518 = vld [vmem:[#allocation2 + $0x2a0] sm:$0xff]
        %v519 = vld [vmem:[#allocation2 + $0x2a8] sm:$0xff]
        %v520 = vld [vmem:[#allocation2 + $0x2b0] sm:$0xff]
        %v521 = vld [vmem:[#allocation2 + $0x2b8] sm:$0xff]
        %v522 = vld [vmem:[#allocation2 + $0x2c0] sm:$0xff]
        %v523 = vld [vmem:[#allocation2 + $0x2c8] sm:$0xff]
        %v524 = vld [vmem:[#allocation2 + $0x2d0] sm:$0xff]
        %v525 = vld [vmem:[#allocation2 + $0x2d8] sm:$0xff]
        %v526 = vld [vmem:[#allocation2 + $0x2e0] sm:$0xff]
        %v527 = vld [vmem:[#allocation2 + $0x2e8] sm:$0xff]
        %v528 = vld [vmem:[#allocation2 + $0x2f0] sm:$0xff]
        %v529 = vld [vmem:[#allocation2 + $0x2f8] sm:$0xff]
        %v530 = vld [vmem:[#allocation2 + $0x300] sm:$0xff]
        %v531 = vld [vmem:[#allocation2 + $0x308] sm:$0xff]
        %v532 = vld [vmem:[#allocation2 + $0x310] sm:$0xff]
        %v533 = vld [vmem:[#allocation2 + $0x318] sm:$0xff]
        %v534 = vld [vmem:[#allocation2 + $0x320] sm:$0xff]
        %v535 = vld [vmem:[#allocation2 + $0x328] sm:$0xff]
        %v536 = vld [vmem:[#allocation2 + $0x330] sm:$0xff]
        %v537 = vld [vmem:[#allocation2 + $0x338] sm:$0xff]
        %v538 = vld [vmem:[#allocation2 + $0x340] sm:$0xff]
        %v539 = vld [vmem:[#allocation2 + $0x348] sm:$0xff]
        %v540 = vld [vmem:[#allocation2 + $0x350] sm:$0xff]
        %v541 = vld [vmem:[#allocation2 + $0x358] sm:$0xff]
        %v542 = vld [vmem:[#allocation2 + $0x360] sm:$0xff]
        %v543 = vld [vmem:[#allocation2 + $0x368] sm:$0xff]
        %v544 = vld [vmem:[#allocation2 + $0x370] sm:$0xff]
        %v545 = vld [vmem:[#allocation2 + $0x378] sm:$0xff]
        %v546 = vld [vmem:[#allocation2 + $0x380] sm:$0xff]
        %v547 = vld [vmem:[#allocation2 + $0x388] sm:$0xff]
        %v548 = vld [vmem:[#allocation2 + $0x390] sm:$0xff]
        %v549 = vld [vmem:[#allocation2 + $0x398] sm:$0xff]
        %v550 = vld [vmem:[#allocation2 + $0x3a0] sm:$0xff]
        %v551 = vld [vmem:[#allocation2 + $0x3a8] sm:$0xff]
        %v552 = vld [vmem:[#allocation2 + $0x3b0] sm:$0xff]
        %v553 = vld [vmem:[#allocation2 + $0x3b8] sm:$0xff]
        %v554 = vld [vmem:[#allocation2 + $0x3c0] sm:$0xff]
        %v555 = vld [vmem:[#allocation2 + $0x3c8] sm:$0xff]
        %v556 = vld [vmem:[#allocation2 + $0x3d0] sm:$0xff]
        %v557 = vld [vmem:[#allocation2 + $0x3d8] sm:$0xff]
        %v558 = vld [vmem:[#allocation2 + $0x3e0] sm:$0xff]
        %v559 = vld [vmem:[#allocation2 + $0x3e8] sm:$0xff]
        %v560 = vld [vmem:[#allocation2 + $0x3f0] sm:$0xff]
        %v561 = vld [vmem:[#allocation2 + $0x3f8] sm:$0xff]
        %v562 = vld [vmem:[%s244] sm:$0xff]
        %v563 = vld [vmem:[%s244 + $0x8] sm:$0xff]
        %v564 = vld [vmem:[%s244 + $0x10] sm:$0xff]
        %v565 = vld [vmem:[%s244 + $0x18] sm:$0xff]
        %v566 = vld [vmem:[%s244 + $0x20] sm:$0xff]
        %v567 = vld [vmem:[%s244 + $0x28] sm:$0xff]
        %v568 = vld [vmem:[%s244 + $0x30] sm:$0xff]
        %v569 = vld [vmem:[%s244 + $0x38] sm:$0xff]
        %v570 = vld [vmem:[%s244 + $0x40] sm:$0xff]
        %v571 = vld [vmem:[%s244 + $0x48] sm:$0xff]
        %v572 = vld [vmem:[%s244 + $0x50] sm:$0xff]
        %v573 = vld [vmem:[%s244 + $0x58] sm:$0xff]
        %v574 = vld [vmem:[%s244 + $0x60] sm:$0xff]
        %v575 = vld [vmem:[%s244 + $0x68] sm:$0xff]
        %v576 = vld [vmem:[%s244 + $0x70] sm:$0xff]
        %v577 = vld [vmem:[%s244 + $0x78] sm:$0xff]
        %v578 = vld [vmem:[%s244 + $0x80] sm:$0xff]
        %v579 = vld [vmem:[%s244 + $0x88] sm:$0xff]
        %v580 = vld [vmem:[%s244 + $0x90] sm:$0xff]
        %v581 = vld [vmem:[%s244 + $0x98] sm:$0xff]
        %v582 = vld [vmem:[%s244 + $0xa0] sm:$0xff]
        %v583 = vld [vmem:[%s244 + $0xa8] sm:$0xff]
        %v584 = vld [vmem:[%s244 + $0xb0] sm:$0xff]
        %v585 = vld [vmem:[%s244 + $0xb8] sm:$0xff]
        %v586 = vld [vmem:[%s244 + $0xc0] sm:$0xff]
        %v587 = vld [vmem:[%s244 + $0xc8] sm:$0xff]
        %v588 = vld [vmem:[%s244 + $0xd0] sm:$0xff]
        %v589 = vld [vmem:[%s244 + $0xd8] sm:$0xff]
        %v590 = vld [vmem:[%s244 + $0xe0] sm:$0xff]
        %v591 = vld [vmem:[%s244 + $0xe8] sm:$0xff]
        %v592 = vld [vmem:[%s244 + $0xf0] sm:$0xff]
        %v593 = vld [vmem:[%s244 + $0xf8] sm:$0xff]
        %v594 = vld [vmem:[%s244 + $0x100] sm:$0xff]
        %v595 = vld [vmem:[%s244 + $0x108] sm:$0xff]
        %v596 = vld [vmem:[%s244 + $0x110] sm:$0xff]
        %v597 = vld [vmem:[%s244 + $0x118] sm:$0xff]
        %v598 = vld [vmem:[%s244 + $0x120] sm:$0xff]
        %v599 = vld [vmem:[%s244 + $0x128] sm:$0xff]
        %v600 = vld [vmem:[%s244 + $0x130] sm:$0xff]
        %v601 = vld [vmem:[%s244 + $0x138] sm:$0xff]
        %v602 = vld [vmem:[%s244 + $0x140] sm:$0xff]
        %v603 = vld [vmem:[%s244 + $0x148] sm:$0xff]
        %v604 = vld [vmem:[%s244 + $0x150] sm:$0xff]
        %v605 = vld [vmem:[%s244 + $0x158] sm:$0xff]
        %v606 = vld [vmem:[%s244 + $0x160] sm:$0xff]
        %v607 = vld [vmem:[%s244 + $0x168] sm:$0xff]
        %v608 = vld [vmem:[%s244 + $0x170] sm:$0xff]
        %v609 = vld [vmem:[%s244 + $0x178] sm:$0xff]
        %v610 = vld [vmem:[%s244 + $0x180] sm:$0xff]
        %v611 = vld [vmem:[%s244 + $0x188] sm:$0xff]
        %v612 = vld [vmem:[%s244 + $0x190] sm:$0xff]
        %v613 = vld [vmem:[%s244 + $0x198] sm:$0xff]
        %v614 = vld [vmem:[%s244 + $0x1a0] sm:$0xff]
        %v615 = vld [vmem:[%s244 + $0x1a8] sm:$0xff]
        %v616 = vld [vmem:[%s244 + $0x1b0] sm:$0xff]
        %v617 = vld [vmem:[%s244 + $0x1b8] sm:$0xff]
        %v618 = vld [vmem:[%s244 + $0x1c0] sm:$0xff]
        %v619 = vld [vmem:[%s244 + $0x1c8] sm:$0xff]
        %v620 = vld [vmem:[%s244 + $0x1d0] sm:$0xff]
        %v621 = vld [vmem:[%s244 + $0x1d8] sm:$0xff]
        %v622 = vld [vmem:[%s244 + $0x1e0] sm:$0xff]
        %v623 = vld [vmem:[%s244 + $0x1e8] sm:$0xff]
        %v624 = vld [vmem:[%s244 + $0x1f0] sm:$0xff]
        %v625 = vld [vmem:[%s244 + $0x1f8] sm:$0xff]
        %v626 = vld [vmem:[%s244 + $0x200] sm:$0xff]
        %v627 = vld [vmem:[%s244 + $0x208] sm:$0xff]
        %v628 = vld [vmem:[%s244 + $0x210] sm:$0xff]
        %v629 = vld [vmem:[%s244 + $0x218] sm:$0xff]
        %v630 = vld [vmem:[%s244 + $0x220] sm:$0xff]
        %v631 = vld [vmem:[%s244 + $0x228] sm:$0xff]
        %v632 = vld [vmem:[%s244 + $0x230] sm:$0xff]
        %v633 = vld [vmem:[%s244 + $0x238] sm:$0xff]
        %v634 = vld [vmem:[%s244 + $0x240] sm:$0xff]
        %v635 = vld [vmem:[%s244 + $0x248] sm:$0xff]
        %v636 = vld [vmem:[%s244 + $0x250] sm:$0xff]
        %v637 = vld [vmem:[%s244 + $0x258] sm:$0xff]
        %v638 = vld [vmem:[%s244 + $0x260] sm:$0xff]
        %v639 = vld [vmem:[%s244 + $0x268] sm:$0xff]
        %v640 = vld [vmem:[%s244 + $0x270] sm:$0xff]
        %v641 = vld [vmem:[%s244 + $0x278] sm:$0xff]
        %v642 = vld [vmem:[%s244 + $0x280] sm:$0xff]
        %v643 = vld [vmem:[%s244 + $0x288] sm:$0xff]
        %v644 = vld [vmem:[%s244 + $0x290] sm:$0xff]
        %v645 = vld [vmem:[%s244 + $0x298] sm:$0xff]
        %v646 = vld [vmem:[%s244 + $0x2a0] sm:$0xff]
        %v647 = vld [vmem:[%s244 + $0x2a8] sm:$0xff]
        %v648 = vld [vmem:[%s244 + $0x2b0] sm:$0xff]
        %v649 = vld [vmem:[%s244 + $0x2b8] sm:$0xff]
        %v650 = vld [vmem:[%s244 + $0x2c0] sm:$0xff]
        %v651 = vld [vmem:[%s244 + $0x2c8] sm:$0xff]
        %v652 = vld [vmem:[%s244 + $0x2d0] sm:$0xff]
        %v653 = vld [vmem:[%s244 + $0x2d8] sm:$0xff]
        %v654 = vld [vmem:[%s244 + $0x2e0] sm:$0xff]
        %v655 = vld [vmem:[%s244 + $0x2e8] sm:$0xff]
        %v656 = vld [vmem:[%s244 + $0x2f0] sm:$0xff]
        %v657 = vld [vmem:[%s244 + $0x2f8] sm:$0xff]
        %v658 = vld [vmem:[%s244 + $0x300] sm:$0xff]
        %v659 = vld [vmem:[%s244 + $0x308] sm:$0xff]
        %v660 = vld [vmem:[%s244 + $0x310] sm:$0xff]
        %v661 = vld [vmem:[%s244 + $0x318] sm:$0xff]
        %v662 = vld [vmem:[%s244 + $0x320] sm:$0xff]
        %v663 = vld [vmem:[%s244 + $0x328] sm:$0xff]
        %v664 = vld [vmem:[%s244 + $0x330] sm:$0xff]
        %v665 = vld [vmem:[%s244 + $0x338] sm:$0xff]
        %v666 = vld [vmem:[%s244 + $0x340] sm:$0xff]
        %v667 = vld [vmem:[%s244 + $0x348] sm:$0xff]
        %v668 = vld [vmem:[%s244 + $0x350] sm:$0xff]
        %v669 = vld [vmem:[%s244 + $0x358] sm:$0xff]
        %v670 = vld [vmem:[%s244 + $0x360] sm:$0xff]
        %v671 = vld [vmem:[%s244 + $0x368] sm:$0xff]
        %v672 = vld [vmem:[%s244 + $0x370] sm:$0xff]
        %v673 = vld [vmem:[%s244 + $0x378] sm:$0xff]
        %v674 = vld [vmem:[%s244 + $0x380] sm:$0xff]
        %v675 = vld [vmem:[%s244 + $0x388] sm:$0xff]
        %v676 = vld [vmem:[%s244 + $0x390] sm:$0xff]
        %v677 = vld [vmem:[%s244 + $0x398] sm:$0xff]
        %v678 = vld [vmem:[%s244 + $0x3a0] sm:$0xff]
        %v679 = vld [vmem:[%s244 + $0x3a8] sm:$0xff]
        %v680 = vld [vmem:[%s244 + $0x3b0] sm:$0xff]
        %v681 = vld [vmem:[%s244 + $0x3b8] sm:$0xff]
        %v682 = vld [vmem:[%s244 + $0x3c0] sm:$0xff]
        %v683 = vld [vmem:[%s244 + $0x3c8] sm:$0xff]
        %v684 = vld [vmem:[%s244 + $0x3d0] sm:$0xff]
        %v685 = vld [vmem:[%s244 + $0x3d8] sm:$0xff]
        %v686 = vld [vmem:[%s244 + $0x3e0] sm:$0xff]
        %v687 = vld [vmem:[%s244 + $0x3e8] sm:$0xff]
        %v688 = vld [vmem:[%s244 + $0x3f0] sm:$0xff]
        %v689 = vld [vmem:[%s244 + $0x3f8] sm:$0xff]
        %v690 = vpack.c.bf16 %v564, %v562
        %v691 = vpack.c.bf16 %v565, %v563
        %v692 = vpack.c.bf16 %v568, %v566
        %v693 = vpack.c.bf16 %v569, %v567
        %v694 = vpack.c.bf16 %v572, %v570
        %v695 = vpack.c.bf16 %v573, %v571
        %v696 = vpack.c.bf16 %v576, %v574
        %v697 = vpack.c.bf16 %v577, %v575
        %v698 = vpack.c.bf16 %v580, %v578
        %v699 = vpack.c.bf16 %v581, %v579
        %v700 = vpack.c.bf16 %v584, %v582
        %v701 = vpack.c.bf16 %v585, %v583
        %v702 = vpack.c.bf16 %v588, %v586
        %v703 = vpack.c.bf16 %v589, %v587
        %v704 = vpack.c.bf16 %v592, %v590
        %v705 = vpack.c.bf16 %v593, %v591
        %v706 = vpack.c.bf16 %v596, %v594
        %v707 = vpack.c.bf16 %v597, %v595
        %v708 = vpack.c.bf16 %v600, %v598
        %v709 = vpack.c.bf16 %v601, %v599
        %v710 = vpack.c.bf16 %v604, %v602
        %v711 = vpack.c.bf16 %v605, %v603
        %v712 = vpack.c.bf16 %v608, %v606
        %v713 = vpack.c.bf16 %v609, %v607
        %v714 = vpack.c.bf16 %v612, %v610
        %v715 = vpack.c.bf16 %v613, %v611
        %v716 = vpack.c.bf16 %v616, %v614
        %v717 = vpack.c.bf16 %v617, %v615
        %v718 = vpack.c.bf16 %v620, %v618
        %v719 = vpack.c.bf16 %v621, %v619
        %v720 = vpack.c.bf16 %v624, %v622
        %v721 = vpack.c.bf16 %v625, %v623
        %v722 = vpack.c.bf16 %v628, %v626
        %v723 = vpack.c.bf16 %v629, %v627
        %v724 = vpack.c.bf16 %v632, %v630
        %v725 = vpack.c.bf16 %v633, %v631
        %v726 = vpack.c.bf16 %v636, %v634
        %v727 = vpack.c.bf16 %v637, %v635
        %v728 = vpack.c.bf16 %v640, %v638
        %v729 = vpack.c.bf16 %v641, %v639
        %v730 = vpack.c.bf16 %v644, %v642
        %v731 = vpack.c.bf16 %v645, %v643
        %v732 = vpack.c.bf16 %v648, %v646
        %v733 = vpack.c.bf16 %v649, %v647
        %v734 = vpack.c.bf16 %v652, %v650
        %v735 = vpack.c.bf16 %v653, %v651
        %v736 = vpack.c.bf16 %v656, %v654
        %v737 = vpack.c.bf16 %v657, %v655
        %v738 = vpack.c.bf16 %v660, %v658
        %v739 = vpack.c.bf16 %v661, %v659
        %v740 = vpack.c.bf16 %v664, %v662
        %v741 = vpack.c.bf16 %v665, %v663
        %v742 = vpack.c.bf16 %v668, %v666
        %v743 = vpack.c.bf16 %v669, %v667
        %v744 = vpack.c.bf16 %v672, %v670
        %v745 = vpack.c.bf16 %v673, %v671
        %v746 = vpack.c.bf16 %v676, %v674
        %v747 = vpack.c.bf16 %v677, %v675
        %v748 = vpack.c.bf16 %v680, %v678
        %v749 = vpack.c.bf16 %v681, %v679
        %v750 = vpack.c.bf16 %v684, %v682
        %v751 = vpack.c.bf16 %v685, %v683
        %v752 = vpack.c.bf16 %v688, %v686
        %v753 = vpack.c.bf16 %v689, %v687
        %v754 = vld [vmem:[%s253] sm:$0xff]
        %v755 = vld [vmem:[%s253 + $0x8] sm:$0xff]
        %v756 = vld [vmem:[%s253 + $0x10] sm:$0xff]
        %v757 = vld [vmem:[%s253 + $0x18] sm:$0xff]
        %v758 = vld [vmem:[%s253 + $0x20] sm:$0xff]
        %v759 = vld [vmem:[%s253 + $0x28] sm:$0xff]
        %v760 = vld [vmem:[%s253 + $0x30] sm:$0xff]
        %v761 = vld [vmem:[%s253 + $0x38] sm:$0xff]
        %v762 = vld [vmem:[%s253 + $0x40] sm:$0xff]
        %v763 = vld [vmem:[%s253 + $0x48] sm:$0xff]
        %v764 = vld [vmem:[%s253 + $0x50] sm:$0xff]
        %v765 = vld [vmem:[%s253 + $0x58] sm:$0xff]
        %v766 = vld [vmem:[%s253 + $0x60] sm:$0xff]
        %v767 = vld [vmem:[%s253 + $0x68] sm:$0xff]
        %v768 = vld [vmem:[%s253 + $0x70] sm:$0xff]
        %v769 = vld [vmem:[%s253 + $0x78] sm:$0xff]
        %v770 = vld [vmem:[%s253 + $0x80] sm:$0xff]
        %v771 = vld [vmem:[%s253 + $0x88] sm:$0xff]
        %v772 = vld [vmem:[%s253 + $0x90] sm:$0xff]
        %v773 = vld [vmem:[%s253 + $0x98] sm:$0xff]
        %v774 = vld [vmem:[%s253 + $0xa0] sm:$0xff]
        %v775 = vld [vmem:[%s253 + $0xa8] sm:$0xff]
        %v776 = vld [vmem:[%s253 + $0xb0] sm:$0xff]
        %v777 = vld [vmem:[%s253 + $0xb8] sm:$0xff]
        %v778 = vld [vmem:[%s253 + $0xc0] sm:$0xff]
        %v779 = vld [vmem:[%s253 + $0xc8] sm:$0xff]
        %v780 = vld [vmem:[%s253 + $0xd0] sm:$0xff]
        %v781 = vld [vmem:[%s253 + $0xd8] sm:$0xff]
        %v782 = vld [vmem:[%s253 + $0xe0] sm:$0xff]
        %v783 = vld [vmem:[%s253 + $0xe8] sm:$0xff]
        %v784 = vld [vmem:[%s253 + $0xf0] sm:$0xff]
        %v785 = vld [vmem:[%s253 + $0xf8] sm:$0xff]
        %v818 = vunpack.c.l.b16 %v754
        %v819 = vunpack.c.h.b16 %v754
        %v820 = vunpack.c.l.b16 %v755
        %v821 = vunpack.c.h.b16 %v755
        %v822 = vunpack.c.l.b16 %v756
        %v823 = vunpack.c.h.b16 %v756
        %v824 = vunpack.c.l.b16 %v757
        %v825 = vunpack.c.h.b16 %v757
        %v826 = vunpack.c.l.b16 %v758
        %v827 = vunpack.c.h.b16 %v758
        %v828 = vunpack.c.l.b16 %v759
        %v829 = vunpack.c.h.b16 %v759
        %v830 = vunpack.c.l.b16 %v760
        %v831 = vunpack.c.h.b16 %v760
        %v832 = vunpack.c.l.b16 %v761
        %v833 = vunpack.c.h.b16 %v761
        %v834 = vunpack.c.l.b16 %v762
        %v835 = vunpack.c.h.b16 %v762
        %v836 = vunpack.c.l.b16 %v763
        %v837 = vunpack.c.h.b16 %v763
        %v838 = vunpack.c.l.b16 %v764
        %v839 = vunpack.c.h.b16 %v764
        %v840 = vunpack.c.l.b16 %v765
        %v841 = vunpack.c.h.b16 %v765
        %v842 = vunpack.c.l.b16 %v766
        %v843 = vunpack.c.h.b16 %v766
        %v844 = vunpack.c.l.b16 %v767
        %v845 = vunpack.c.h.b16 %v767
        %v846 = vunpack.c.l.b16 %v768
        %v847 = vunpack.c.h.b16 %v768
        %v848 = vunpack.c.l.b16 %v769
        %v849 = vunpack.c.h.b16 %v769
        %v850 = vunpack.c.l.b16 %v770
        %v851 = vunpack.c.h.b16 %v770
        %v852 = vunpack.c.l.b16 %v771
        %v853 = vunpack.c.h.b16 %v771
        %v854 = vunpack.c.l.b16 %v772
        %v855 = vunpack.c.h.b16 %v772
        %v856 = vunpack.c.l.b16 %v773
        %v857 = vunpack.c.h.b16 %v773
        %v858 = vunpack.c.l.b16 %v774
        %v859 = vunpack.c.h.b16 %v774
        %v860 = vunpack.c.l.b16 %v775
        %v861 = vunpack.c.h.b16 %v775
        %v862 = vunpack.c.l.b16 %v776
        %v863 = vunpack.c.h.b16 %v776
        %v864 = vunpack.c.l.b16 %v777
        %v865 = vunpack.c.h.b16 %v777
        %v866 = vunpack.c.l.b16 %v778
        %v867 = vunpack.c.h.b16 %v778
        %v868 = vunpack.c.l.b16 %v779
        %v869 = vunpack.c.h.b16 %v779
        %v870 = vunpack.c.l.b16 %v780
        %v871 = vunpack.c.h.b16 %v780
        %v872 = vunpack.c.l.b16 %v781
        %v873 = vunpack.c.h.b16 %v781
        %v874 = vunpack.c.l.b16 %v782
        %v875 = vunpack.c.h.b16 %v782
        %v876 = vunpack.c.l.b16 %v783
        %v877 = vunpack.c.h.b16 %v783
        %v878 = vunpack.c.l.b16 %v784
        %v879 = vunpack.c.h.b16 %v784
        %v880 = vunpack.c.l.b16 %v785
        %v881 = vunpack.c.h.b16 %v785
        %v882 = vpack.c.b16 %v820, %v818
        %v883 = vpack.c.b16 %v821, %v819
        %v884 = vpack.c.b16 %v824, %v822
        %v885 = vpack.c.b16 %v825, %v823
        %v886 = vpack.c.b16 %v828, %v826
        %v887 = vpack.c.b16 %v829, %v827
        %v888 = vpack.c.b16 %v832, %v830
        %v889 = vpack.c.b16 %v833, %v831
        %v890 = vpack.c.b16 %v836, %v834
        %v891 = vpack.c.b16 %v837, %v835
        %v892 = vpack.c.b16 %v840, %v838
        %v893 = vpack.c.b16 %v841, %v839
        %v894 = vpack.c.b16 %v844, %v842
        %v895 = vpack.c.b16 %v845, %v843
        %v896 = vpack.c.b16 %v848, %v846
        %v897 = vpack.c.b16 %v849, %v847
        %v898 = vpack.c.b16 %v852, %v850
        %v899 = vpack.c.b16 %v853, %v851
        %v900 = vpack.c.b16 %v856, %v854
        %v901 = vpack.c.b16 %v857, %v855
        %v902 = vpack.c.b16 %v860, %v858
        %v903 = vpack.c.b16 %v861, %v859
        %v904 = vpack.c.b16 %v864, %v862
        %v905 = vpack.c.b16 %v865, %v863
        %v906 = vpack.c.b16 %v868, %v866
        %v907 = vpack.c.b16 %v869, %v867
        %v908 = vpack.c.b16 %v872, %v870
        %v909 = vpack.c.b16 %v873, %v871
        %v910 = vpack.c.b16 %v876, %v874
        %v911 = vpack.c.b16 %v877, %v875
        %v912 = vpack.c.b16 %v880, %v878
        %v913 = vpack.c.b16 %v881, %v879
        %946 = vmatprep.subr.bf16.mxu0 %v897
        %947 = vmatpush1.bf16.msra.mxu0 %v896
        %948 = vmatprep.subr.bf16.mxu0 %v895
        %949 = vmatpush1.bf16.msra.mxu0 %v894
        %950 = vmatprep.subr.bf16.mxu0 %v893
        %951 = vmatpush1.bf16.msra.mxu0 %v892
        %952 = vmatprep.subr.bf16.mxu0 %v891
        %953 = vmatpush1.bf16.msra.mxu0 %v890
        %954 = vmatprep.subr.bf16.mxu0 %v889
        %955 = vmatpush1.bf16.msra.mxu0 %v888
        %956 = vmatprep.subr.bf16.mxu0 %v887
        %957 = vmatpush1.bf16.msra.mxu0 %v886
        %958 = vmatprep.subr.bf16.mxu0 %v885
        %959 = vmatpush1.bf16.msra.mxu0 %v884
        %960 = vmatprep.subr.bf16.mxu0 %v883
        %961 = vmatpush1.bf16.msra.mxu0 %v882
        %962 = vmatprep.subr.bf16.mxu0 %v913
        %963 = vmatpush2.bf16.msra.mxu0 %v912
        %964 = vmatprep.subr.bf16.mxu0 %v911
        %965 = vmatpush2.bf16.msra.mxu0 %v910
        %966 = vmatprep.subr.bf16.mxu0 %v909
        %967 = vmatpush2.bf16.msra.mxu0 %v908
        %968 = vmatprep.subr.bf16.mxu0 %v907
        %969 = vmatpush2.bf16.msra.mxu0 %v906
        %970 = vmatprep.subr.bf16.mxu0 %v905
        %971 = vmatpush2.bf16.msra.mxu0 %v904
        %972 = vmatprep.subr.bf16.mxu0 %v903
        %973 = vmatpush2.bf16.msra.mxu0 %v902
        %974 = vmatprep.subr.bf16.mxu0 %v901
        %975 = vmatpush2.bf16.msra.mxu0 %v900
        %976 = vmatprep.subr.bf16.mxu0 %v899
        %977 = vmatpush2.bf16.msra.mxu0 %v898
        %978 = vmatprep.mubr.bf16.mxu0 %v691
        %979 = vmatmul.mubr.bf16.gmra.mxu0 %v690
        %v980 = vpop.f32.mrf.mxu0
        %v981 = vadd.f32 0.0, %v980
        %v982 = vpop.f32.mrf.mxu0
        %v983 = vadd.f32 0.0, %v982
        %v984 = vpop.f32.mrf.mxu0
        %v985 = vadd.f32 0.0, %v984
        %v986 = vpop.f32.mrf.mxu0
        %v987 = vadd.f32 0.0, %v986
        %988 = vmatprep.mubr.bf16.mxu0 %v693
        %989 = vmatmul.mubr.bf16.gmra.mxu0 %v692
        %v990 = vpop.f32.mrf.mxu0
        %v991 = vadd.f32 0.0, %v990
        %v992 = vpop.f32.mrf.mxu0
        %v993 = vadd.f32 0.0, %v992
        %v994 = vpop.f32.mrf.mxu0
        %v995 = vadd.f32 0.0, %v994
        %v996 = vpop.f32.mrf.mxu0
        %v997 = vadd.f32 0.0, %v996
        %998 = vmatprep.mubr.bf16.mxu0 %v695
        %999 = vmatmul.mubr.bf16.gmra.mxu0 %v694
        %v1000 = vpop.f32.mrf.mxu0
        %v1001 = vadd.f32 0.0, %v1000
        %v1002 = vpop.f32.mrf.mxu0
        %v1003 = vadd.f32 0.0, %v1002
        %v1004 = vpop.f32.mrf.mxu0
        %v1005 = vadd.f32 0.0, %v1004
        %v1006 = vpop.f32.mrf.mxu0
        %v1007 = vadd.f32 0.0, %v1006
        %1008 = vmatprep.mubr.bf16.mxu0 %v697
        %1009 = vmatmul.mubr.bf16.gmra.mxu0 %v696
        %v1010 = vpop.f32.mrf.mxu0
        %v1011 = vadd.f32 0.0, %v1010
        %v1012 = vpop.f32.mrf.mxu0
        %v1013 = vadd.f32 0.0, %v1012
        %v1014 = vpop.f32.mrf.mxu0
        %v1015 = vadd.f32 0.0, %v1014
        %v1016 = vpop.f32.mrf.mxu0
        %v1017 = vadd.f32 0.0, %v1016
        %1018 = vmatprep.mubr.bf16.mxu0 %v699
        %1019 = vmatmul.mubr.bf16.gmra.mxu0 %v698
        %v1020 = vpop.f32.mrf.mxu0
        %v1021 = vadd.f32 0.0, %v1020
        %v1022 = vpop.f32.mrf.mxu0
        %v1023 = vadd.f32 0.0, %v1022
        %v1024 = vpop.f32.mrf.mxu0
        %v1025 = vadd.f32 0.0, %v1024
        %v1026 = vpop.f32.mrf.mxu0
        %v1027 = vadd.f32 0.0, %v1026
        %1028 = vmatprep.mubr.bf16.mxu0 %v701
        %1029 = vmatmul.mubr.bf16.gmra.mxu0 %v700
        %v1030 = vpop.f32.mrf.mxu0
        %v1031 = vadd.f32 0.0, %v1030
        %v1032 = vpop.f32.mrf.mxu0
        %v1033 = vadd.f32 0.0, %v1032
        %v1034 = vpop.f32.mrf.mxu0
        %v1035 = vadd.f32 0.0, %v1034
        %v1036 = vpop.f32.mrf.mxu0
        %v1037 = vadd.f32 0.0, %v1036
        %1038 = vmatprep.mubr.bf16.mxu0 %v703
        %1039 = vmatmul.mubr.bf16.gmra.mxu0 %v702
        %v1040 = vpop.f32.mrf.mxu0
        %v1041 = vadd.f32 0.0, %v1040
        %v1042 = vpop.f32.mrf.mxu0
        %v1043 = vadd.f32 0.0, %v1042
        %v1044 = vpop.f32.mrf.mxu0
        %v1045 = vadd.f32 0.0, %v1044
        %v1046 = vpop.f32.mrf.mxu0
        %v1047 = vadd.f32 0.0, %v1046
        %1048 = vmatprep.mubr.bf16.mxu0 %v705
        %1049 = vmatmul.mubr.bf16.gmra.mxu0 %v704
        %v1050 = vpop.f32.mrf.mxu0
        %v1051 = vadd.f32 0.0, %v1050
        %v1052 = vpop.f32.mrf.mxu0
        %v1053 = vadd.f32 0.0, %v1052
        %v1054 = vpop.f32.mrf.mxu0
        %v1055 = vadd.f32 0.0, %v1054
        %v1056 = vpop.f32.mrf.mxu0
        %v1057 = vadd.f32 0.0, %v1056
        %1058 = vmatprep.mubr.bf16.mxu0 %v707
        %1059 = vmatmul.mubr.bf16.gmra.mxu0 %v706
        %v1060 = vpop.f32.mrf.mxu0
        %v1061 = vadd.f32 0.0, %v1060
        %v1062 = vpop.f32.mrf.mxu0
        %v1063 = vadd.f32 0.0, %v1062
        %v1064 = vpop.f32.mrf.mxu0
        %v1065 = vadd.f32 0.0, %v1064
        %v1066 = vpop.f32.mrf.mxu0
        %v1067 = vadd.f32 0.0, %v1066
        %1068 = vmatprep.mubr.bf16.mxu0 %v709
        %1069 = vmatmul.mubr.bf16.gmra.mxu0 %v708
        %v1070 = vpop.f32.mrf.mxu0
        %v1071 = vadd.f32 0.0, %v1070
        %v1072 = vpop.f32.mrf.mxu0
        %v1073 = vadd.f32 0.0, %v1072
        %v1074 = vpop.f32.mrf.mxu0
        %v1075 = vadd.f32 0.0, %v1074
        %v1076 = vpop.f32.mrf.mxu0
        %v1077 = vadd.f32 0.0, %v1076
        %1078 = vmatprep.mubr.bf16.mxu0 %v711
        %1079 = vmatmul.mubr.bf16.gmra.mxu0 %v710
        %v1080 = vpop.f32.mrf.mxu0
        %v1081 = vadd.f32 0.0, %v1080
        %v1082 = vpop.f32.mrf.mxu0
        %v1083 = vadd.f32 0.0, %v1082
        %v1084 = vpop.f32.mrf.mxu0
        %v1085 = vadd.f32 0.0, %v1084
        %v1086 = vpop.f32.mrf.mxu0
        %v1087 = vadd.f32 0.0, %v1086
        %1088 = vmatprep.mubr.bf16.mxu0 %v713
        %1089 = vmatmul.mubr.bf16.gmra.mxu0 %v712
        %v1090 = vpop.f32.mrf.mxu0
        %v1091 = vadd.f32 0.0, %v1090
        %v1092 = vpop.f32.mrf.mxu0
        %v1093 = vadd.f32 0.0, %v1092
        %v1094 = vpop.f32.mrf.mxu0
        %v1095 = vadd.f32 0.0, %v1094
        %v1096 = vpop.f32.mrf.mxu0
        %v1097 = vadd.f32 0.0, %v1096
        %1098 = vmatprep.mubr.bf16.mxu0 %v715
        %1099 = vmatmul.mubr.bf16.gmra.mxu0 %v714
        %v1100 = vpop.f32.mrf.mxu0
        %v1101 = vadd.f32 0.0, %v1100
        %v1102 = vpop.f32.mrf.mxu0
        %v1103 = vadd.f32 0.0, %v1102
        %v1104 = vpop.f32.mrf.mxu0
        %v1105 = vadd.f32 0.0, %v1104
        %v1106 = vpop.f32.mrf.mxu0
        %v1107 = vadd.f32 0.0, %v1106
        %1108 = vmatprep.mubr.bf16.mxu0 %v717
        %1109 = vmatmul.mubr.bf16.gmra.mxu0 %v716
        %v1110 = vpop.f32.mrf.mxu0
        %v1111 = vadd.f32 0.0, %v1110
        %v1112 = vpop.f32.mrf.mxu0
        %v1113 = vadd.f32 0.0, %v1112
        %v1114 = vpop.f32.mrf.mxu0
        %v1115 = vadd.f32 0.0, %v1114
        %v1116 = vpop.f32.mrf.mxu0
        %v1117 = vadd.f32 0.0, %v1116
        %1118 = vmatprep.mubr.bf16.mxu0 %v719
        %1119 = vmatmul.mubr.bf16.gmra.mxu0 %v718
        %v1120 = vpop.f32.mrf.mxu0
        %v1121 = vadd.f32 0.0, %v1120
        %v1122 = vpop.f32.mrf.mxu0
        %v1123 = vadd.f32 0.0, %v1122
        %v1124 = vpop.f32.mrf.mxu0
        %v1125 = vadd.f32 0.0, %v1124
        %v1126 = vpop.f32.mrf.mxu0
        %v1127 = vadd.f32 0.0, %v1126
        %1128 = vmatprep.mubr.bf16.mxu0 %v721
        %1129 = vmatmul.mubr.bf16.gmra.mxu0 %v720
        %v1130 = vpop.f32.mrf.mxu0
        %v1131 = vadd.f32 0.0, %v1130
        %v1132 = vpop.f32.mrf.mxu0
        %v1133 = vadd.f32 0.0, %v1132
        %v1134 = vpop.f32.mrf.mxu0
        %v1135 = vadd.f32 0.0, %v1134
        %v1136 = vpop.f32.mrf.mxu0
        %v1137 = vadd.f32 0.0, %v1136
        %1138 = vmatprep.mubr.bf16.mxu0 %v723
        %1139 = vmatmul.mubr.bf16.gmra.mxu0 %v722
        %v1140 = vpop.f32.mrf.mxu0
        %v1141 = vadd.f32 0.0, %v1140
        %v1142 = vpop.f32.mrf.mxu0
        %v1143 = vadd.f32 0.0, %v1142
        %v1144 = vpop.f32.mrf.mxu0
        %v1145 = vadd.f32 0.0, %v1144
        %v1146 = vpop.f32.mrf.mxu0
        %v1147 = vadd.f32 0.0, %v1146
        %1148 = vmatprep.mubr.bf16.mxu0 %v725
        %1149 = vmatmul.mubr.bf16.gmra.mxu0 %v724
        %v1150 = vpop.f32.mrf.mxu0
        %v1151 = vadd.f32 0.0, %v1150
        %v1152 = vpop.f32.mrf.mxu0
        %v1153 = vadd.f32 0.0, %v1152
        %v1154 = vpop.f32.mrf.mxu0
        %v1155 = vadd.f32 0.0, %v1154
        %v1156 = vpop.f32.mrf.mxu0
        %v1157 = vadd.f32 0.0, %v1156
        %1158 = vmatprep.mubr.bf16.mxu0 %v727
        %1159 = vmatmul.mubr.bf16.gmra.mxu0 %v726
        %v1160 = vpop.f32.mrf.mxu0
        %v1161 = vadd.f32 0.0, %v1160
        %v1162 = vpop.f32.mrf.mxu0
        %v1163 = vadd.f32 0.0, %v1162
        %v1164 = vpop.f32.mrf.mxu0
        %v1165 = vadd.f32 0.0, %v1164
        %v1166 = vpop.f32.mrf.mxu0
        %v1167 = vadd.f32 0.0, %v1166
        %1168 = vmatprep.mubr.bf16.mxu0 %v729
        %1169 = vmatmul.mubr.bf16.gmra.mxu0 %v728
        %v1170 = vpop.f32.mrf.mxu0
        %v1171 = vadd.f32 0.0, %v1170
        %v1172 = vpop.f32.mrf.mxu0
        %v1173 = vadd.f32 0.0, %v1172
        %v1174 = vpop.f32.mrf.mxu0
        %v1175 = vadd.f32 0.0, %v1174
        %v1176 = vpop.f32.mrf.mxu0
        %v1177 = vadd.f32 0.0, %v1176
        %1178 = vmatprep.mubr.bf16.mxu0 %v731
        %1179 = vmatmul.mubr.bf16.gmra.mxu0 %v730
        %v1180 = vpop.f32.mrf.mxu0
        %v1181 = vadd.f32 0.0, %v1180
        %v1182 = vpop.f32.mrf.mxu0
        %v1183 = vadd.f32 0.0, %v1182
        %v1184 = vpop.f32.mrf.mxu0
        %v1185 = vadd.f32 0.0, %v1184
        %v1186 = vpop.f32.mrf.mxu0
        %v1187 = vadd.f32 0.0, %v1186
        %1188 = vmatprep.mubr.bf16.mxu0 %v733
        %1189 = vmatmul.mubr.bf16.gmra.mxu0 %v732
        %v1190 = vpop.f32.mrf.mxu0
        %v1191 = vadd.f32 0.0, %v1190
        %v1192 = vpop.f32.mrf.mxu0
        %v1193 = vadd.f32 0.0, %v1192
        %v1194 = vpop.f32.mrf.mxu0
        %v1195 = vadd.f32 0.0, %v1194
        %v1196 = vpop.f32.mrf.mxu0
        %v1197 = vadd.f32 0.0, %v1196
        %1198 = vmatprep.mubr.bf16.mxu0 %v735
        %1199 = vmatmul.mubr.bf16.gmra.mxu0 %v734
        %v1200 = vpop.f32.mrf.mxu0
        %v1201 = vadd.f32 0.0, %v1200
        %v1202 = vpop.f32.mrf.mxu0
        %v1203 = vadd.f32 0.0, %v1202
        %v1204 = vpop.f32.mrf.mxu0
        %v1205 = vadd.f32 0.0, %v1204
        %v1206 = vpop.f32.mrf.mxu0
        %v1207 = vadd.f32 0.0, %v1206
        %1208 = vmatprep.mubr.bf16.mxu0 %v737
        %1209 = vmatmul.mubr.bf16.gmra.mxu0 %v736
        %v1210 = vpop.f32.mrf.mxu0
        %v1211 = vadd.f32 0.0, %v1210
        %v1212 = vpop.f32.mrf.mxu0
        %v1213 = vadd.f32 0.0, %v1212
        %v1214 = vpop.f32.mrf.mxu0
        %v1215 = vadd.f32 0.0, %v1214
        %v1216 = vpop.f32.mrf.mxu0
        %v1217 = vadd.f32 0.0, %v1216
        %1218 = vmatprep.mubr.bf16.mxu0 %v739
        %1219 = vmatmul.mubr.bf16.gmra.mxu0 %v738
        %v1220 = vpop.f32.mrf.mxu0
        %v1221 = vadd.f32 0.0, %v1220
        %v1222 = vpop.f32.mrf.mxu0
        %v1223 = vadd.f32 0.0, %v1222
        %v1224 = vpop.f32.mrf.mxu0
        %v1225 = vadd.f32 0.0, %v1224
        %v1226 = vpop.f32.mrf.mxu0
        %v1227 = vadd.f32 0.0, %v1226
        %1228 = vmatprep.mubr.bf16.mxu0 %v741
        %1229 = vmatmul.mubr.bf16.gmra.mxu0 %v740
        %v1230 = vpop.f32.mrf.mxu0
        %v1231 = vadd.f32 0.0, %v1230
        %v1232 = vpop.f32.mrf.mxu0
        %v1233 = vadd.f32 0.0, %v1232
        %v1234 = vpop.f32.mrf.mxu0
        %v1235 = vadd.f32 0.0, %v1234
        %v1236 = vpop.f32.mrf.mxu0
        %v1237 = vadd.f32 0.0, %v1236
        %1238 = vmatprep.mubr.bf16.mxu0 %v743
        %1239 = vmatmul.mubr.bf16.gmra.mxu0 %v742
        %v1240 = vpop.f32.mrf.mxu0
        %v1241 = vadd.f32 0.0, %v1240
        %v1242 = vpop.f32.mrf.mxu0
        %v1243 = vadd.f32 0.0, %v1242
        %v1244 = vpop.f32.mrf.mxu0
        %v1245 = vadd.f32 0.0, %v1244
        %v1246 = vpop.f32.mrf.mxu0
        %v1247 = vadd.f32 0.0, %v1246
        %1248 = vmatprep.mubr.bf16.mxu0 %v745
        %1249 = vmatmul.mubr.bf16.gmra.mxu0 %v744
        %v1250 = vpop.f32.mrf.mxu0
        %v1251 = vadd.f32 0.0, %v1250
        %v1252 = vpop.f32.mrf.mxu0
        %v1253 = vadd.f32 0.0, %v1252
        %v1254 = vpop.f32.mrf.mxu0
        %v1255 = vadd.f32 0.0, %v1254
        %v1256 = vpop.f32.mrf.mxu0
        %v1257 = vadd.f32 0.0, %v1256
        %1258 = vmatprep.mubr.bf16.mxu0 %v747
        %1259 = vmatmul.mubr.bf16.gmra.mxu0 %v746
        %v1260 = vpop.f32.mrf.mxu0
        %v1261 = vadd.f32 0.0, %v1260
        %v1262 = vpop.f32.mrf.mxu0
        %v1263 = vadd.f32 0.0, %v1262
        %v1264 = vpop.f32.mrf.mxu0
        %v1265 = vadd.f32 0.0, %v1264
        %v1266 = vpop.f32.mrf.mxu0
        %v1267 = vadd.f32 0.0, %v1266
        %1268 = vmatprep.mubr.bf16.mxu0 %v749
        %1269 = vmatmul.mubr.bf16.gmra.mxu0 %v748
        %v1270 = vpop.f32.mrf.mxu0
        %v1271 = vadd.f32 0.0, %v1270
        %v1272 = vpop.f32.mrf.mxu0
        %v1273 = vadd.f32 0.0, %v1272
        %v1274 = vpop.f32.mrf.mxu0
        %v1275 = vadd.f32 0.0, %v1274
        %v1276 = vpop.f32.mrf.mxu0
        %v1277 = vadd.f32 0.0, %v1276
        %1278 = vmatprep.mubr.bf16.mxu0 %v751
        %1279 = vmatmul.mubr.bf16.gmra.mxu0 %v750
        %v1280 = vpop.f32.mrf.mxu0
        %v1281 = vadd.f32 0.0, %v1280
        %v1282 = vpop.f32.mrf.mxu0
        %v1283 = vadd.f32 0.0, %v1282
        %v1284 = vpop.f32.mrf.mxu0
        %v1285 = vadd.f32 0.0, %v1284
        %v1286 = vpop.f32.mrf.mxu0
        %v1287 = vadd.f32 0.0, %v1286
        %1288 = vmatprep.mubr.bf16.mxu0 %v753
        %1289 = vmatmul.mubr.bf16.gmra.mxu0 %v752
        %v1290 = vpop.f32.mrf.mxu0
        %v1291 = vadd.f32 0.0, %v1290
        %v1292 = vpop.f32.mrf.mxu0
        %v1293 = vadd.f32 0.0, %v1292
        %v1294 = vpop.f32.mrf.mxu0
        %v1295 = vadd.f32 0.0, %v1294
        %v1296 = vpop.f32.mrf.mxu0
        %v1297 = vadd.f32 0.0, %v1296
        %1298 = vdwg.mxu0
        %v1299 = vadd.f32 %v434, %v981
        %v1300 = vadd.f32 %v435, %v983
        %v1301 = vadd.f32 %v436, %v985
        %v1302 = vadd.f32 %v437, %v987
        %v1303 = vadd.f32 %v438, %v991
        %v1304 = vadd.f32 %v439, %v993
        %v1305 = vadd.f32 %v440, %v995
        %v1306 = vadd.f32 %v441, %v997
        %v1307 = vadd.f32 %v442, %v1001
        %v1308 = vadd.f32 %v443, %v1003
        %v1309 = vadd.f32 %v444, %v1005
        %v1310 = vadd.f32 %v445, %v1007
        %v1311 = vadd.f32 %v446, %v1011
        %v1312 = vadd.f32 %v447, %v1013
        %v1313 = vadd.f32 %v448, %v1015
        %v1314 = vadd.f32 %v449, %v1017
        %v1315 = vadd.f32 %v450, %v1021
        %v1316 = vadd.f32 %v451, %v1023
        %v1317 = vadd.f32 %v452, %v1025
        %v1318 = vadd.f32 %v453, %v1027
        %v1319 = vadd.f32 %v454, %v1031
        %v1320 = vadd.f32 %v455, %v1033
        %v1321 = vadd.f32 %v456, %v1035
        %v1322 = vadd.f32 %v457, %v1037
        %v1323 = vadd.f32 %v458, %v1041
        %v1324 = vadd.f32 %v459, %v1043
        %v1325 = vadd.f32 %v460, %v1045
        %v1326 = vadd.f32 %v461, %v1047
        %v1327 = vadd.f32 %v462, %v1051
        %v1328 = vadd.f32 %v463, %v1053
        %v1329 = vadd.f32 %v464, %v1055
        %v1330 = vadd.f32 %v465, %v1057
        %v1331 = vadd.f32 %v466, %v1061
        %v1332 = vadd.f32 %v467, %v1063
        %v1333 = vadd.f32 %v468, %v1065
        %v1334 = vadd.f32 %v469, %v1067
        %v1335 = vadd.f32 %v470, %v1071
        %v1336 = vadd.f32 %v471, %v1073
        %v1337 = vadd.f32 %v472, %v1075
        %v1338 = vadd.f32 %v473, %v1077
        %v1339 = vadd.f32 %v474, %v1081
        %v1340 = vadd.f32 %v475, %v1083
        %v1341 = vadd.f32 %v476, %v1085
        %v1342 = vadd.f32 %v477, %v1087
        %v1343 = vadd.f32 %v478, %v1091
        %v1344 = vadd.f32 %v479, %v1093
        %v1345 = vadd.f32 %v480, %v1095
        %v1346 = vadd.f32 %v481, %v1097
        %v1347 = vadd.f32 %v482, %v1101
        %v1348 = vadd.f32 %v483, %v1103
        %v1349 = vadd.f32 %v484, %v1105
        %v1350 = vadd.f32 %v485, %v1107
        %v1351 = vadd.f32 %v486, %v1111
        %v1352 = vadd.f32 %v487, %v1113
        %v1353 = vadd.f32 %v488, %v1115
        %v1354 = vadd.f32 %v489, %v1117
        %v1355 = vadd.f32 %v490, %v1121
        %v1356 = vadd.f32 %v491, %v1123
        %v1357 = vadd.f32 %v492, %v1125
        %v1358 = vadd.f32 %v493, %v1127
        %v1359 = vadd.f32 %v494, %v1131
        %v1360 = vadd.f32 %v495, %v1133
        %v1361 = vadd.f32 %v496, %v1135
        %v1362 = vadd.f32 %v497, %v1137
        %v1363 = vadd.f32 %v498, %v1141
        %v1364 = vadd.f32 %v499, %v1143
        %v1365 = vadd.f32 %v500, %v1145
        %v1366 = vadd.f32 %v501, %v1147
        %v1367 = vadd.f32 %v502, %v1151
        %v1368 = vadd.f32 %v503, %v1153
        %v1369 = vadd.f32 %v504, %v1155
        %v1370 = vadd.f32 %v505, %v1157
        %v1371 = vadd.f32 %v506, %v1161
        %v1372 = vadd.f32 %v507, %v1163
        %v1373 = vadd.f32 %v508, %v1165
        %v1374 = vadd.f32 %v509, %v1167
        %v1375 = vadd.f32 %v510, %v1171
        %v1376 = vadd.f32 %v511, %v1173
        %v1377 = vadd.f32 %v512, %v1175
        %v1378 = vadd.f32 %v513, %v1177
        %v1379 = vadd.f32 %v514, %v1181
        %v1380 = vadd.f32 %v515, %v1183
        %v1381 = vadd.f32 %v516, %v1185
        %v1382 = vadd.f32 %v517, %v1187
        %v1383 = vadd.f32 %v518, %v1191
        %v1384 = vadd.f32 %v519, %v1193
        %v1385 = vadd.f32 %v520, %v1195
        %v1386 = vadd.f32 %v521, %v1197
        %v1387 = vadd.f32 %v522, %v1201
        %v1388 = vadd.f32 %v523, %v1203
        %v1389 = vadd.f32 %v524, %v1205
        %v1390 = vadd.f32 %v525, %v1207
        %v1391 = vadd.f32 %v526, %v1211
        %v1392 = vadd.f32 %v527, %v1213
        %v1393 = vadd.f32 %v528, %v1215
        %v1394 = vadd.f32 %v529, %v1217
        %v1395 = vadd.f32 %v530, %v1221
        %v1396 = vadd.f32 %v531, %v1223
        %v1397 = vadd.f32 %v532, %v1225
        %v1398 = vadd.f32 %v533, %v1227
        %v1399 = vadd.f32 %v534, %v1231
        %v1400 = vadd.f32 %v535, %v1233
        %v1401 = vadd.f32 %v536, %v1235
        %v1402 = vadd.f32 %v537, %v1237
        %v1403 = vadd.f32 %v538, %v1241
        %v1404 = vadd.f32 %v539, %v1243
        %v1405 = vadd.f32 %v540, %v1245
        %v1406 = vadd.f32 %v541, %v1247
        %v1407 = vadd.f32 %v542, %v1251
        %v1408 = vadd.f32 %v543, %v1253
        %v1409 = vadd.f32 %v544, %v1255
        %v1410 = vadd.f32 %v545, %v1257
        %v1411 = vadd.f32 %v546, %v1261
        %v1412 = vadd.f32 %v547, %v1263
        %v1413 = vadd.f32 %v548, %v1265
        %v1414 = vadd.f32 %v549, %v1267
        %v1415 = vadd.f32 %v550, %v1271
        %v1416 = vadd.f32 %v551, %v1273
        %v1417 = vadd.f32 %v552, %v1275
        %v1418 = vadd.f32 %v553, %v1277
        %v1419 = vadd.f32 %v554, %v1281
        %v1420 = vadd.f32 %v555, %v1283
        %v1421 = vadd.f32 %v556, %v1285
        %v1422 = vadd.f32 %v557, %v1287
        %v1423 = vadd.f32 %v558, %v1291
        %v1424 = vadd.f32 %v559, %v1293
        %v1425 = vadd.f32 %v560, %v1295
        %v1426 = vadd.f32 %v561, %v1297
        %1427 = vst [vmem:[#allocation2] sm:$0xff] %v1299
        %1428 = vst [vmem:[#allocation2 + $0x8] sm:$0xff] %v1300
        %1429 = vst [vmem:[#allocation2 + $0x10] sm:$0xff] %v1301
        %1430 = vst [vmem:[#allocation2 + $0x18] sm:$0xff] %v1302
        %1431 = vst [vmem:[#allocation2 + $0x20] sm:$0xff] %v1303
        %1432 = vst [vmem:[#allocation2 + $0x28] sm:$0xff] %v1304
        %1433 = vst [vmem:[#allocation2 + $0x30] sm:$0xff] %v1305
        %1434 = vst [vmem:[#allocation2 + $0x38] sm:$0xff] %v1306
        %1435 = vst [vmem:[#allocation2 + $0x40] sm:$0xff] %v1307
        %1436 = vst [vmem:[#allocation2 + $0x48] sm:$0xff] %v1308
        %1437 = vst [vmem:[#allocation2 + $0x50] sm:$0xff] %v1309
        %1438 = vst [vmem:[#allocation2 + $0x58] sm:$0xff] %v1310
        %1439 = vst [vmem:[#allocation2 + $0x60] sm:$0xff] %v1311
        %1440 = vst [vmem:[#allocation2 + $0x68] sm:$0xff] %v1312
        %1441 = vst [vmem:[#allocation2 + $0x70] sm:$0xff] %v1313
        %1442 = vst [vmem:[#allocation2 + $0x78] sm:$0xff] %v1314
        %1443 = vst [vmem:[#allocation2 + $0x80] sm:$0xff] %v1315
        %1444 = vst [vmem:[#allocation2 + $0x88] sm:$0xff] %v1316
        %1445 = vst [vmem:[#allocation2 + $0x90] sm:$0xff] %v1317
        %1446 = vst [vmem:[#allocation2 + $0x98] sm:$0xff] %v1318
        %1447 = vst [vmem:[#allocation2 + $0xa0] sm:$0xff] %v1319
        %1448 = vst [vmem:[#allocation2 + $0xa8] sm:$0xff] %v1320
        %1449 = vst [vmem:[#allocation2 + $0xb0] sm:$0xff] %v1321
        %1450 = vst [vmem:[#allocation2 + $0xb8] sm:$0xff] %v1322
        %1451 = vst [vmem:[#allocation2 + $0xc0] sm:$0xff] %v1323
        %1452 = vst [vmem:[#allocation2 + $0xc8] sm:$0xff] %v1324
        %1453 = vst [vmem:[#allocation2 + $0xd0] sm:$0xff] %v1325
        %1454 = vst [vmem:[#allocation2 + $0xd8] sm:$0xff] %v1326
        %1455 = vst [vmem:[#allocation2 + $0xe0] sm:$0xff] %v1327
        %1456 = vst [vmem:[#allocation2 + $0xe8] sm:$0xff] %v1328
        %1457 = vst [vmem:[#allocation2 + $0xf0] sm:$0xff] %v1329
        %1458 = vst [vmem:[#allocation2 + $0xf8] sm:$0xff] %v1330
        %1459 = vst [vmem:[#allocation2 + $0x100] sm:$0xff] %v1331
        %1460 = vst [vmem:[#allocation2 + $0x108] sm:$0xff] %v1332
        %1461 = vst [vmem:[#allocation2 + $0x110] sm:$0xff] %v1333
        %1462 = vst [vmem:[#allocation2 + $0x118] sm:$0xff] %v1334
        %1463 = vst [vmem:[#allocation2 + $0x120] sm:$0xff] %v1335
        %1464 = vst [vmem:[#allocation2 + $0x128] sm:$0xff] %v1336
        %1465 = vst [vmem:[#allocation2 + $0x130] sm:$0xff] %v1337
        %1466 = vst [vmem:[#allocation2 + $0x138] sm:$0xff] %v1338
        %1467 = vst [vmem:[#allocation2 + $0x140] sm:$0xff] %v1339
        %1468 = vst [vmem:[#allocation2 + $0x148] sm:$0xff] %v1340
        %1469 = vst [vmem:[#allocation2 + $0x150] sm:$0xff] %v1341
        %1470 = vst [vmem:[#allocation2 + $0x158] sm:$0xff] %v1342
        %1471 = vst [vmem:[#allocation2 + $0x160] sm:$0xff] %v1343
        %1472 = vst [vmem:[#allocation2 + $0x168] sm:$0xff] %v1344
        %1473 = vst [vmem:[#allocation2 + $0x170] sm:$0xff] %v1345
        %1474 = vst [vmem:[#allocation2 + $0x178] sm:$0xff] %v1346
        %1475 = vst [vmem:[#allocation2 + $0x180] sm:$0xff] %v1347
        %1476 = vst [vmem:[#allocation2 + $0x188] sm:$0xff] %v1348
        %1477 = vst [vmem:[#allocation2 + $0x190] sm:$0xff] %v1349
        %1478 = vst [vmem:[#allocation2 + $0x198] sm:$0xff] %v1350
        %1479 = vst [vmem:[#allocation2 + $0x1a0] sm:$0xff] %v1351
        %1480 = vst [vmem:[#allocation2 + $0x1a8] sm:$0xff] %v1352
        %1481 = vst [vmem:[#allocation2 + $0x1b0] sm:$0xff] %v1353
        %1482 = vst [vmem:[#allocation2 + $0x1b8] sm:$0xff] %v1354
        %1483 = vst [vmem:[#allocation2 + $0x1c0] sm:$0xff] %v1355
        %1484 = vst [vmem:[#allocation2 + $0x1c8] sm:$0xff] %v1356
        %1485 = vst [vmem:[#allocation2 + $0x1d0] sm:$0xff] %v1357
        %1486 = vst [vmem:[#allocation2 + $0x1d8] sm:$0xff] %v1358
        %1487 = vst [vmem:[#allocation2 + $0x1e0] sm:$0xff] %v1359
        %1488 = vst [vmem:[#allocation2 + $0x1e8] sm:$0xff] %v1360
        %1489 = vst [vmem:[#allocation2 + $0x1f0] sm:$0xff] %v1361
        %1490 = vst [vmem:[#allocation2 + $0x1f8] sm:$0xff] %v1362
        %1491 = vst [vmem:[#allocation2 + $0x200] sm:$0xff] %v1363
        %1492 = vst [vmem:[#allocation2 + $0x208] sm:$0xff] %v1364
        %1493 = vst [vmem:[#allocation2 + $0x210] sm:$0xff] %v1365
        %1494 = vst [vmem:[#allocation2 + $0x218] sm:$0xff] %v1366
        %1495 = vst [vmem:[#allocation2 + $0x220] sm:$0xff] %v1367
        %1496 = vst [vmem:[#allocation2 + $0x228] sm:$0xff] %v1368
        %1497 = vst [vmem:[#allocation2 + $0x230] sm:$0xff] %v1369
        %1498 = vst [vmem:[#allocation2 + $0x238] sm:$0xff] %v1370
        %1499 = vst [vmem:[#allocation2 + $0x240] sm:$0xff] %v1371
        %1500 = vst [vmem:[#allocation2 + $0x248] sm:$0xff] %v1372
        %1501 = vst [vmem:[#allocation2 + $0x250] sm:$0xff] %v1373
        %1502 = vst [vmem:[#allocation2 + $0x258] sm:$0xff] %v1374
        %1503 = vst [vmem:[#allocation2 + $0x260] sm:$0xff] %v1375
        %1504 = vst [vmem:[#allocation2 + $0x268] sm:$0xff] %v1376
        %1505 = vst [vmem:[#allocation2 + $0x270] sm:$0xff] %v1377
        %1506 = vst [vmem:[#allocation2 + $0x278] sm:$0xff] %v1378
        %1507 = vst [vmem:[#allocation2 + $0x280] sm:$0xff] %v1379
        %1508 = vst [vmem:[#allocation2 + $0x288] sm:$0xff] %v1380
        %1509 = vst [vmem:[#allocation2 + $0x290] sm:$0xff] %v1381
        %1510 = vst [vmem:[#allocation2 + $0x298] sm:$0xff] %v1382
        %1511 = vst [vmem:[#allocation2 + $0x2a0] sm:$0xff] %v1383
        %1512 = vst [vmem:[#allocation2 + $0x2a8] sm:$0xff] %v1384
        %1513 = vst [vmem:[#allocation2 + $0x2b0] sm:$0xff] %v1385
        %1514 = vst [vmem:[#allocation2 + $0x2b8] sm:$0xff] %v1386
        %1515 = vst [vmem:[#allocation2 + $0x2c0] sm:$0xff] %v1387
        %1516 = vst [vmem:[#allocation2 + $0x2c8] sm:$0xff] %v1388
        %1517 = vst [vmem:[#allocation2 + $0x2d0] sm:$0xff] %v1389
        %1518 = vst [vmem:[#allocation2 + $0x2d8] sm:$0xff] %v1390
        %1519 = vst [vmem:[#allocation2 + $0x2e0] sm:$0xff] %v1391
        %1520 = vst [vmem:[#allocation2 + $0x2e8] sm:$0xff] %v1392
        %1521 = vst [vmem:[#allocation2 + $0x2f0] sm:$0xff] %v1393
        %1522 = vst [vmem:[#allocation2 + $0x2f8] sm:$0xff] %v1394
        %1523 = vst [vmem:[#allocation2 + $0x300] sm:$0xff] %v1395
        %1524 = vst [vmem:[#allocation2 + $0x308] sm:$0xff] %v1396
        %1525 = vst [vmem:[#allocation2 + $0x310] sm:$0xff] %v1397
        %1526 = vst [vmem:[#allocation2 + $0x318] sm:$0xff] %v1398
        %1527 = vst [vmem:[#allocation2 + $0x320] sm:$0xff] %v1399
        %1528 = vst [vmem:[#allocation2 + $0x328] sm:$0xff] %v1400
        %1529 = vst [vmem:[#allocation2 + $0x330] sm:$0xff] %v1401
        %1530 = vst [vmem:[#allocation2 + $0x338] sm:$0xff] %v1402
        %1531 = vst [vmem:[#allocation2 + $0x340] sm:$0xff] %v1403
        %1532 = vst [vmem:[#allocation2 + $0x348] sm:$0xff] %v1404
        %1533 = vst [vmem:[#allocation2 + $0x350] sm:$0xff] %v1405
        %1534 = vst [vmem:[#allocation2 + $0x358] sm:$0xff] %v1406
        %1535 = vst [vmem:[#allocation2 + $0x360] sm:$0xff] %v1407
        %1536 = vst [vmem:[#allocation2 + $0x368] sm:$0xff] %v1408
        %1537 = vst [vmem:[#allocation2 + $0x370] sm:$0xff] %v1409
        %1538 = vst [vmem:[#allocation2 + $0x378] sm:$0xff] %v1410
        %1539 = vst [vmem:[#allocation2 + $0x380] sm:$0xff] %v1411
        %1540 = vst [vmem:[#allocation2 + $0x388] sm:$0xff] %v1412
        %1541 = vst [vmem:[#allocation2 + $0x390] sm:$0xff] %v1413
        %1542 = vst [vmem:[#allocation2 + $0x398] sm:$0xff] %v1414
        %1543 = vst [vmem:[#allocation2 + $0x3a0] sm:$0xff] %v1415
        %1544 = vst [vmem:[#allocation2 + $0x3a8] sm:$0xff] %v1416
        %1545 = vst [vmem:[#allocation2 + $0x3b0] sm:$0xff] %v1417
        %1546 = vst [vmem:[#allocation2 + $0x3b8] sm:$0xff] %v1418
        %1547 = vst [vmem:[#allocation2 + $0x3c0] sm:$0xff] %v1419
        %1548 = vst [vmem:[#allocation2 + $0x3c8] sm:$0xff] %v1420
        %1549 = vst [vmem:[#allocation2 + $0x3d0] sm:$0xff] %v1421
        %1550 = vst [vmem:[#allocation2 + $0x3d8] sm:$0xff] %v1422
        %1551 = vst [vmem:[#allocation2 + $0x3e0] sm:$0xff] %v1423
        %1552 = vst [vmem:[#allocation2 + $0x3e8] sm:$0xff] %v1424
        %1553 = vst [vmem:[#allocation2 + $0x3f0] sm:$0xff] %v1425
        %1554 = vst [vmem:[#allocation2 + $0x3f8] sm:$0xff] %v1426
        // Predicated region
        $region49: #{tpu_custom_call.1} parent=31 // pred_check
          %p1555 = pneg %p302
        $region50: #{tpu_custom_call.1} parent=31 // pred_check_branch
          %1557 = sbr.rel (%p1555) target = $region52
        $region51: #{tpu_custom_call.1} parent=31 // pred_region
          %v1558 = vld [vmem:[#allocation2] sm:$0xff]
          %v1559 = vld [vmem:[#allocation2 + $0x8] sm:$0xff]
          %v1560 = vld [vmem:[#allocation2 + $0x10] sm:$0xff]
          %v1561 = vld [vmem:[#allocation2 + $0x18] sm:$0xff]
          %v1562 = vld [vmem:[#allocation2 + $0x20] sm:$0xff]
          %v1563 = vld [vmem:[#allocation2 + $0x28] sm:$0xff]
          %v1564 = vld [vmem:[#allocation2 + $0x30] sm:$0xff]
          %v1565 = vld [vmem:[#allocation2 + $0x38] sm:$0xff]
          %v1566 = vld [vmem:[#allocation2 + $0x40] sm:$0xff]
          %v1567 = vld [vmem:[#allocation2 + $0x48] sm:$0xff]
          %v1568 = vld [vmem:[#allocation2 + $0x50] sm:$0xff]
          %v1569 = vld [vmem:[#allocation2 + $0x58] sm:$0xff]
          %v1570 = vld [vmem:[#allocation2 + $0x60] sm:$0xff]
          %v1571 = vld [vmem:[#allocation2 + $0x68] sm:$0xff]
          %v1572 = vld [vmem:[#allocation2 + $0x70] sm:$0xff]
          %v1573 = vld [vmem:[#allocation2 + $0x78] sm:$0xff]
          %v1574 = vld [vmem:[#allocation2 + $0x80] sm:$0xff]
          %v1575 = vld [vmem:[#allocation2 + $0x88] sm:$0xff]
          %v1576 = vld [vmem:[#allocation2 + $0x90] sm:$0xff]
          %v1577 = vld [vmem:[#allocation2 + $0x98] sm:$0xff]
          %v1578 = vld [vmem:[#allocation2 + $0xa0] sm:$0xff]
          %v1579 = vld [vmem:[#allocation2 + $0xa8] sm:$0xff]
          %v1580 = vld [vmem:[#allocation2 + $0xb0] sm:$0xff]
          %v1581 = vld [vmem:[#allocation2 + $0xb8] sm:$0xff]
          %v1582 = vld [vmem:[#allocation2 + $0xc0] sm:$0xff]
          %v1583 = vld [vmem:[#allocation2 + $0xc8] sm:$0xff]
          %v1584 = vld [vmem:[#allocation2 + $0xd0] sm:$0xff]
          %v1585 = vld [vmem:[#allocation2 + $0xd8] sm:$0xff]
          %v1586 = vld [vmem:[#allocation2 + $0xe0] sm:$0xff]
          %v1587 = vld [vmem:[#allocation2 + $0xe8] sm:$0xff]
          %v1588 = vld [vmem:[#allocation2 + $0xf0] sm:$0xff]
          %v1589 = vld [vmem:[#allocation2 + $0xf8] sm:$0xff]
          %v1590 = vld [vmem:[#allocation2 + $0x100] sm:$0xff]
          %v1591 = vld [vmem:[#allocation2 + $0x108] sm:$0xff]
          %v1592 = vld [vmem:[#allocation2 + $0x110] sm:$0xff]
          %v1593 = vld [vmem:[#allocation2 + $0x118] sm:$0xff]
          %v1594 = vld [vmem:[#allocation2 + $0x120] sm:$0xff]
          %v1595 = vld [vmem:[#allocation2 + $0x128] sm:$0xff]
          %v1596 = vld [vmem:[#allocation2 + $0x130] sm:$0xff]
          %v1597 = vld [vmem:[#allocation2 + $0x138] sm:$0xff]
          %v1598 = vld [vmem:[#allocation2 + $0x140] sm:$0xff]
          %v1599 = vld [vmem:[#allocation2 + $0x148] sm:$0xff]
          %v1600 = vld [vmem:[#allocation2 + $0x150] sm:$0xff]
          %v1601 = vld [vmem:[#allocation2 + $0x158] sm:$0xff]
          %v1602 = vld [vmem:[#allocation2 + $0x160] sm:$0xff]
          %v1603 = vld [vmem:[#allocation2 + $0x168] sm:$0xff]
          %v1604 = vld [vmem:[#allocation2 + $0x170] sm:$0xff]
          %v1605 = vld [vmem:[#allocation2 + $0x178] sm:$0xff]
          %v1606 = vld [vmem:[#allocation2 + $0x180] sm:$0xff]
          %v1607 = vld [vmem:[#allocation2 + $0x188] sm:$0xff]
          %v1608 = vld [vmem:[#allocation2 + $0x190] sm:$0xff]
          %v1609 = vld [vmem:[#allocation2 + $0x198] sm:$0xff]
          %v1610 = vld [vmem:[#allocation2 + $0x1a0] sm:$0xff]
          %v1611 = vld [vmem:[#allocation2 + $0x1a8] sm:$0xff]
          %v1612 = vld [vmem:[#allocation2 + $0x1b0] sm:$0xff]
          %v1613 = vld [vmem:[#allocation2 + $0x1b8] sm:$0xff]
          %v1614 = vld [vmem:[#allocation2 + $0x1c0] sm:$0xff]
          %v1615 = vld [vmem:[#allocation2 + $0x1c8] sm:$0xff]
          %v1616 = vld [vmem:[#allocation2 + $0x1d0] sm:$0xff]
          %v1617 = vld [vmem:[#allocation2 + $0x1d8] sm:$0xff]
          %v1618 = vld [vmem:[#allocation2 + $0x1e0] sm:$0xff]
          %v1619 = vld [vmem:[#allocation2 + $0x1e8] sm:$0xff]
          %v1620 = vld [vmem:[#allocation2 + $0x1f0] sm:$0xff]
          %v1621 = vld [vmem:[#allocation2 + $0x1f8] sm:$0xff]
          %v1622 = vld [vmem:[#allocation2 + $0x200] sm:$0xff]
          %v1623 = vld [vmem:[#allocation2 + $0x208] sm:$0xff]
          %v1624 = vld [vmem:[#allocation2 + $0x210] sm:$0xff]
          %v1625 = vld [vmem:[#allocation2 + $0x218] sm:$0xff]
          %v1626 = vld [vmem:[#allocation2 + $0x220] sm:$0xff]
          %v1627 = vld [vmem:[#allocation2 + $0x228] sm:$0xff]
          %v1628 = vld [vmem:[#allocation2 + $0x230] sm:$0xff]
          %v1629 = vld [vmem:[#allocation2 + $0x238] sm:$0xff]
          %v1630 = vld [vmem:[#allocation2 + $0x240] sm:$0xff]
          %v1631 = vld [vmem:[#allocation2 + $0x248] sm:$0xff]
          %v1632 = vld [vmem:[#allocation2 + $0x250] sm:$0xff]
          %v1633 = vld [vmem:[#allocation2 + $0x258] sm:$0xff]
          %v1634 = vld [vmem:[#allocation2 + $0x260] sm:$0xff]
          %v1635 = vld [vmem:[#allocation2 + $0x268] sm:$0xff]
          %v1636 = vld [vmem:[#allocation2 + $0x270] sm:$0xff]
          %v1637 = vld [vmem:[#allocation2 + $0x278] sm:$0xff]
          %v1638 = vld [vmem:[#allocation2 + $0x280] sm:$0xff]
          %v1639 = vld [vmem:[#allocation2 + $0x288] sm:$0xff]
          %v1640 = vld [vmem:[#allocation2 + $0x290] sm:$0xff]
          %v1641 = vld [vmem:[#allocation2 + $0x298] sm:$0xff]
          %v1642 = vld [vmem:[#allocation2 + $0x2a0] sm:$0xff]
          %v1643 = vld [vmem:[#allocation2 + $0x2a8] sm:$0xff]
          %v1644 = vld [vmem:[#allocation2 + $0x2b0] sm:$0xff]
          %v1645 = vld [vmem:[#allocation2 + $0x2b8] sm:$0xff]
          %v1646 = vld [vmem:[#allocation2 + $0x2c0] sm:$0xff]
          %v1647 = vld [vmem:[#allocation2 + $0x2c8] sm:$0xff]
          %v1648 = vld [vmem:[#allocation2 + $0x2d0] sm:$0xff]
          %v1649 = vld [vmem:[#allocation2 + $0x2d8] sm:$0xff]
          %v1650 = vld [vmem:[#allocation2 + $0x2e0] sm:$0xff]
          %v1651 = vld [vmem:[#allocation2 + $0x2e8] sm:$0xff]
          %v1652 = vld [vmem:[#allocation2 + $0x2f0] sm:$0xff]
          %v1653 = vld [vmem:[#allocation2 + $0x2f8] sm:$0xff]
          %v1654 = vld [vmem:[#allocation2 + $0x300] sm:$0xff]
          %v1655 = vld [vmem:[#allocation2 + $0x308] sm:$0xff]
          %v1656 = vld [vmem:[#allocation2 + $0x310] sm:$0xff]
          %v1657 = vld [vmem:[#allocation2 + $0x318] sm:$0xff]
          %v1658 = vld [vmem:[#allocation2 + $0x320] sm:$0xff]
          %v1659 = vld [vmem:[#allocation2 + $0x328] sm:$0xff]
          %v1660 = vld [vmem:[#allocation2 + $0x330] sm:$0xff]
          %v1661 = vld [vmem:[#allocation2 + $0x338] sm:$0xff]
          %v1662 = vld [vmem:[#allocation2 + $0x340] sm:$0xff]
          %v1663 = vld [vmem:[#allocation2 + $0x348] sm:$0xff]
          %v1664 = vld [vmem:[#allocation2 + $0x350] sm:$0xff]
          %v1665 = vld [vmem:[#allocation2 + $0x358] sm:$0xff]
          %v1666 = vld [vmem:[#allocation2 + $0x360] sm:$0xff]
          %v1667 = vld [vmem:[#allocation2 + $0x368] sm:$0xff]
          %v1668 = vld [vmem:[#allocation2 + $0x370] sm:$0xff]
          %v1669 = vld [vmem:[#allocation2 + $0x378] sm:$0xff]
          %v1670 = vld [vmem:[#allocation2 + $0x380] sm:$0xff]
          %v1671 = vld [vmem:[#allocation2 + $0x388] sm:$0xff]
          %v1672 = vld [vmem:[#allocation2 + $0x390] sm:$0xff]
          %v1673 = vld [vmem:[#allocation2 + $0x398] sm:$0xff]
          %v1674 = vld [vmem:[#allocation2 + $0x3a0] sm:$0xff]
          %v1675 = vld [vmem:[#allocation2 + $0x3a8] sm:$0xff]
          %v1676 = vld [vmem:[#allocation2 + $0x3b0] sm:$0xff]
          %v1677 = vld [vmem:[#allocation2 + $0x3b8] sm:$0xff]
          %v1678 = vld [vmem:[#allocation2 + $0x3c0] sm:$0xff]
          %v1679 = vld [vmem:[#allocation2 + $0x3c8] sm:$0xff]
          %v1680 = vld [vmem:[#allocation2 + $0x3d0] sm:$0xff]
          %v1681 = vld [vmem:[#allocation2 + $0x3d8] sm:$0xff]
          %v1682 = vld [vmem:[#allocation2 + $0x3e0] sm:$0xff]
          %v1683 = vld [vmem:[#allocation2 + $0x3e8] sm:$0xff]
          %v1684 = vld [vmem:[#allocation2 + $0x3f0] sm:$0xff]
          %v1685 = vld [vmem:[#allocation2 + $0x3f8] sm:$0xff]
          %v1686 = vld [vmem:[%s262] sm:$0x3]
          %v1688 = vlaneseq
          %v1689 = vshrl.u32 %v1688, 7
          %v1690 = vsub.s32 0, %v1689
          %v1691 = vrot.slane %v1686, %v1690
          %v1692 = vlaneseq
          %v1693 = vshrl.u32 %v1692, 7
          %v1694 = vsub.s32 1, %v1693
          %v1695 = vrot.slane %v1686, %v1694
          %v1698 = vadd.f32 %v1558, %v1691
          %v1699 = vadd.f32 %v1559, %v1695
          %v1700 = vadd.f32 %v1560, %v1691
          %v1701 = vadd.f32 %v1561, %v1695
          %v1702 = vadd.f32 %v1562, %v1691
          %v1703 = vadd.f32 %v1563, %v1695
          %v1704 = vadd.f32 %v1564, %v1691
          %v1705 = vadd.f32 %v1565, %v1695
          %v1706 = vadd.f32 %v1566, %v1691
          %v1707 = vadd.f32 %v1567, %v1695
          %v1708 = vadd.f32 %v1568, %v1691
          %v1709 = vadd.f32 %v1569, %v1695
          %v1710 = vadd.f32 %v1570, %v1691
          %v1711 = vadd.f32 %v1571, %v1695
          %v1712 = vadd.f32 %v1572, %v1691
          %v1713 = vadd.f32 %v1573, %v1695
          %v1714 = vadd.f32 %v1574, %v1691
          %v1715 = vadd.f32 %v1575, %v1695
          %v1716 = vadd.f32 %v1576, %v1691
          %v1717 = vadd.f32 %v1577, %v1695
          %v1718 = vadd.f32 %v1578, %v1691
          %v1719 = vadd.f32 %v1579, %v1695
          %v1720 = vadd.f32 %v1580, %v1691
          %v1721 = vadd.f32 %v1581, %v1695
          %v1722 = vadd.f32 %v1582, %v1691
          %v1723 = vadd.f32 %v1583, %v1695
          %v1724 = vadd.f32 %v1584, %v1691
          %v1725 = vadd.f32 %v1585, %v1695
          %v1726 = vadd.f32 %v1586, %v1691
          %v1727 = vadd.f32 %v1587, %v1695
          %v1728 = vadd.f32 %v1588, %v1691
          %v1729 = vadd.f32 %v1589, %v1695
          %v1730 = vadd.f32 %v1590, %v1691
          %v1731 = vadd.f32 %v1591, %v1695
          %v1732 = vadd.f32 %v1592, %v1691
          %v1733 = vadd.f32 %v1593, %v1695
          %v1734 = vadd.f32 %v1594, %v1691
          %v1735 = vadd.f32 %v1595, %v1695
          %v1736 = vadd.f32 %v1596, %v1691
          %v1737 = vadd.f32 %v1597, %v1695
          %v1738 = vadd.f32 %v1598, %v1691
          %v1739 = vadd.f32 %v1599, %v1695
          %v1740 = vadd.f32 %v1600, %v1691
          %v1741 = vadd.f32 %v1601, %v1695
          %v1742 = vadd.f32 %v1602, %v1691
          %v1743 = vadd.f32 %v1603, %v1695
          %v1744 = vadd.f32 %v1604, %v1691
          %v1745 = vadd.f32 %v1605, %v1695
          %v1746 = vadd.f32 %v1606, %v1691
          %v1747 = vadd.f32 %v1607, %v1695
          %v1748 = vadd.f32 %v1608, %v1691
          %v1749 = vadd.f32 %v1609, %v1695
          %v1750 = vadd.f32 %v1610, %v1691
          %v1751 = vadd.f32 %v1611, %v1695
          %v1752 = vadd.f32 %v1612, %v1691
          %v1753 = vadd.f32 %v1613, %v1695
          %v1754 = vadd.f32 %v1614, %v1691
          %v1755 = vadd.f32 %v1615, %v1695
          %v1756 = vadd.f32 %v1616, %v1691
          %v1757 = vadd.f32 %v1617, %v1695
          %v1758 = vadd.f32 %v1618, %v1691
          %v1759 = vadd.f32 %v1619, %v1695
          %v1760 = vadd.f32 %v1620, %v1691
          %v1761 = vadd.f32 %v1621, %v1695
          %v1762 = vadd.f32 %v1622, %v1691
          %v1763 = vadd.f32 %v1623, %v1695
          %v1764 = vadd.f32 %v1624, %v1691
          %v1765 = vadd.f32 %v1625, %v1695
          %v1766 = vadd.f32 %v1626, %v1691
          %v1767 = vadd.f32 %v1627, %v1695
          %v1768 = vadd.f32 %v1628, %v1691
          %v1769 = vadd.f32 %v1629, %v1695
          %v1770 = vadd.f32 %v1630, %v1691
          %v1771 = vadd.f32 %v1631, %v1695
          %v1772 = vadd.f32 %v1632, %v1691
          %v1773 = vadd.f32 %v1633, %v1695
          %v1774 = vadd.f32 %v1634, %v1691
          %v1775 = vadd.f32 %v1635, %v1695
          %v1776 = vadd.f32 %v1636, %v1691
          %v1777 = vadd.f32 %v1637, %v1695
          %v1778 = vadd.f32 %v1638, %v1691
          %v1779 = vadd.f32 %v1639, %v1695
          %v1780 = vadd.f32 %v1640, %v1691
          %v1781 = vadd.f32 %v1641, %v1695
          %v1782 = vadd.f32 %v1642, %v1691
          %v1783 = vadd.f32 %v1643, %v1695
          %v1784 = vadd.f32 %v1644, %v1691
          %v1785 = vadd.f32 %v1645, %v1695
          %v1786 = vadd.f32 %v1646, %v1691
          %v1787 = vadd.f32 %v1647, %v1695
          %v1788 = vadd.f32 %v1648, %v1691
          %v1789 = vadd.f32 %v1649, %v1695
          %v1790 = vadd.f32 %v1650, %v1691
          %v1791 = vadd.f32 %v1651, %v1695
          %v1792 = vadd.f32 %v1652, %v1691
          %v1793 = vadd.f32 %v1653, %v1695
          %v1794 = vadd.f32 %v1654, %v1691
          %v1795 = vadd.f32 %v1655, %v1695
          %v1796 = vadd.f32 %v1656, %v1691
          %v1797 = vadd.f32 %v1657, %v1695
          %v1798 = vadd.f32 %v1658, %v1691
          %v1799 = vadd.f32 %v1659, %v1695
          %v1800 = vadd.f32 %v1660, %v1691
          %v1801 = vadd.f32 %v1661, %v1695
          %v1802 = vadd.f32 %v1662, %v1691
          %v1803 = vadd.f32 %v1663, %v1695
          %v1804 = vadd.f32 %v1664, %v1691
          %v1805 = vadd.f32 %v1665, %v1695
          %v1806 = vadd.f32 %v1666, %v1691
          %v1807 = vadd.f32 %v1667, %v1695
          %v1808 = vadd.f32 %v1668, %v1691
          %v1809 = vadd.f32 %v1669, %v1695
          %v1810 = vadd.f32 %v1670, %v1691
          %v1811 = vadd.f32 %v1671, %v1695
          %v1812 = vadd.f32 %v1672, %v1691
          %v1813 = vadd.f32 %v1673, %v1695
          %v1814 = vadd.f32 %v1674, %v1691
          %v1815 = vadd.f32 %v1675, %v1695
          %v1816 = vadd.f32 %v1676, %v1691
          %v1817 = vadd.f32 %v1677, %v1695
          %v1818 = vadd.f32 %v1678, %v1691
          %v1819 = vadd.f32 %v1679, %v1695
          %v1820 = vadd.f32 %v1680, %v1691
          %v1821 = vadd.f32 %v1681, %v1695
          %v1822 = vadd.f32 %v1682, %v1691
          %v1823 = vadd.f32 %v1683, %v1695
          %v1824 = vadd.f32 %v1684, %v1691
          %v1825 = vadd.f32 %v1685, %v1695
          %v1826 = vpack.c.bf16 %v1700, %v1698
          %v1827 = vpack.c.bf16 %v1701, %v1699
          %v1828 = vpack.c.bf16 %v1704, %v1702
          %v1829 = vpack.c.bf16 %v1705, %v1703
          %v1830 = vpack.c.bf16 %v1708, %v1706
          %v1831 = vpack.c.bf16 %v1709, %v1707
          %v1832 = vpack.c.bf16 %v1712, %v1710
          %v1833 = vpack.c.bf16 %v1713, %v1711
          %v1834 = vpack.c.bf16 %v1716, %v1714
          %v1835 = vpack.c.bf16 %v1717, %v1715
          %v1836 = vpack.c.bf16 %v1720, %v1718
          %v1837 = vpack.c.bf16 %v1721, %v1719
          %v1838 = vpack.c.bf16 %v1724, %v1722
          %v1839 = vpack.c.bf16 %v1725, %v1723
          %v1840 = vpack.c.bf16 %v1728, %v1726
          %v1841 = vpack.c.bf16 %v1729, %v1727
          %v1842 = vpack.c.bf16 %v1732, %v1730
          %v1843 = vpack.c.bf16 %v1733, %v1731
          %v1844 = vpack.c.bf16 %v1736, %v1734
          %v1845 = vpack.c.bf16 %v1737, %v1735
          %v1846 = vpack.c.bf16 %v1740, %v1738
          %v1847 = vpack.c.bf16 %v1741, %v1739
          %v1848 = vpack.c.bf16 %v1744, %v1742
          %v1849 = vpack.c.bf16 %v1745, %v1743
          %v1850 = vpack.c.bf16 %v1748, %v1746
          %v1851 = vpack.c.bf16 %v1749, %v1747
          %v1852 = vpack.c.bf16 %v1752, %v1750
          %v1853 = vpack.c.bf16 %v1753, %v1751
          %v1854 = vpack.c.bf16 %v1756, %v1754
          %v1855 = vpack.c.bf16 %v1757, %v1755
          %v1856 = vpack.c.bf16 %v1760, %v1758
          %v1857 = vpack.c.bf16 %v1761, %v1759
          %v1858 = vpack.c.bf16 %v1764, %v1762
          %v1859 = vpack.c.bf16 %v1765, %v1763
          %v1860 = vpack.c.bf16 %v1768, %v1766
          %v1861 = vpack.c.bf16 %v1769, %v1767
          %v1862 = vpack.c.bf16 %v1772, %v1770
          %v1863 = vpack.c.bf16 %v1773, %v1771
          %v1864 = vpack.c.bf16 %v1776, %v1774
          %v1865 = vpack.c.bf16 %v1777, %v1775
          %v1866 = vpack.c.bf16 %v1780, %v1778
          %v1867 = vpack.c.bf16 %v1781, %v1779
          %v1868 = vpack.c.bf16 %v1784, %v1782
          %v1869 = vpack.c.bf16 %v1785, %v1783
          %v1870 = vpack.c.bf16 %v1788, %v1786
          %v1871 = vpack.c.bf16 %v1789, %v1787
          %v1872 = vpack.c.bf16 %v1792, %v1790
          %v1873 = vpack.c.bf16 %v1793, %v1791
          %v1874 = vpack.c.bf16 %v1796, %v1794
          %v1875 = vpack.c.bf16 %v1797, %v1795
          %v1876 = vpack.c.bf16 %v1800, %v1798
          %v1877 = vpack.c.bf16 %v1801, %v1799
          %v1878 = vpack.c.bf16 %v1804, %v1802
          %v1879 = vpack.c.bf16 %v1805, %v1803
          %v1880 = vpack.c.bf16 %v1808, %v1806
          %v1881 = vpack.c.bf16 %v1809, %v1807
          %v1882 = vpack.c.bf16 %v1812, %v1810
          %v1883 = vpack.c.bf16 %v1813, %v1811
          %v1884 = vpack.c.bf16 %v1816, %v1814
          %v1885 = vpack.c.bf16 %v1817, %v1815
          %v1886 = vpack.c.bf16 %v1820, %v1818
          %v1887 = vpack.c.bf16 %v1821, %v1819
          %v1888 = vpack.c.bf16 %v1824, %v1822
          %v1889 = vpack.c.bf16 %v1825, %v1823
          %v1954 = vunpack.c.l.b16 %v1826
          %v1955 = vunpack.c.l.b16 %v1827
          %v1956 = vunpack.c.h.b16 %v1826
          %v1957 = vunpack.c.h.b16 %v1827
          %v1958 = vunpack.c.l.b16 %v1828
          %v1959 = vunpack.c.l.b16 %v1829
          %v1960 = vunpack.c.h.b16 %v1828
          %v1961 = vunpack.c.h.b16 %v1829
          %v1962 = vunpack.c.l.b16 %v1830
          %v1963 = vunpack.c.l.b16 %v1831
          %v1964 = vunpack.c.h.b16 %v1830
          %v1965 = vunpack.c.h.b16 %v1831
          %v1966 = vunpack.c.l.b16 %v1832
          %v1967 = vunpack.c.l.b16 %v1833
          %v1968 = vunpack.c.h.b16 %v1832
          %v1969 = vunpack.c.h.b16 %v1833
          %v1970 = vunpack.c.l.b16 %v1834
          %v1971 = vunpack.c.l.b16 %v1835
          %v1972 = vunpack.c.h.b16 %v1834
          %v1973 = vunpack.c.h.b16 %v1835
          %v1974 = vunpack.c.l.b16 %v1836
          %v1975 = vunpack.c.l.b16 %v1837
          %v1976 = vunpack.c.h.b16 %v1836
          %v1977 = vunpack.c.h.b16 %v1837
          %v1978 = vunpack.c.l.b16 %v1838
          %v1979 = vunpack.c.l.b16 %v1839
          %v1980 = vunpack.c.h.b16 %v1838
          %v1981 = vunpack.c.h.b16 %v1839
          %v1982 = vunpack.c.l.b16 %v1840
          %v1983 = vunpack.c.l.b16 %v1841
          %v1984 = vunpack.c.h.b16 %v1840
          %v1985 = vunpack.c.h.b16 %v1841
          %v1986 = vunpack.c.l.b16 %v1842
          %v1987 = vunpack.c.l.b16 %v1843
          %v1988 = vunpack.c.h.b16 %v1842
          %v1989 = vunpack.c.h.b16 %v1843
          %v1990 = vunpack.c.l.b16 %v1844
          %v1991 = vunpack.c.l.b16 %v1845
          %v1992 = vunpack.c.h.b16 %v1844
          %v1993 = vunpack.c.h.b16 %v1845
          %v1994 = vunpack.c.l.b16 %v1846
          %v1995 = vunpack.c.l.b16 %v1847
          %v1996 = vunpack.c.h.b16 %v1846
          %v1997 = vunpack.c.h.b16 %v1847
          %v1998 = vunpack.c.l.b16 %v1848
          %v1999 = vunpack.c.l.b16 %v1849
          %v2000 = vunpack.c.h.b16 %v1848
          %v2001 = vunpack.c.h.b16 %v1849
          %v2002 = vunpack.c.l.b16 %v1850
          %v2003 = vunpack.c.l.b16 %v1851
          %v2004 = vunpack.c.h.b16 %v1850
          %v2005 = vunpack.c.h.b16 %v1851
          %v2006 = vunpack.c.l.b16 %v1852
          %v2007 = vunpack.c.l.b16 %v1853
          %v2008 = vunpack.c.h.b16 %v1852
          %v2009 = vunpack.c.h.b16 %v1853
          %v2010 = vunpack.c.l.b16 %v1854
          %v2011 = vunpack.c.l.b16 %v1855
          %v2012 = vunpack.c.h.b16 %v1854
          %v2013 = vunpack.c.h.b16 %v1855
          %v2014 = vunpack.c.l.b16 %v1856
          %v2015 = vunpack.c.l.b16 %v1857
          %v2016 = vunpack.c.h.b16 %v1856
          %v2017 = vunpack.c.h.b16 %v1857
          %v2018 = vunpack.c.l.b16 %v1858
          %v2019 = vunpack.c.l.b16 %v1859
          %v2020 = vunpack.c.h.b16 %v1858
          %v2021 = vunpack.c.h.b16 %v1859
          %v2022 = vunpack.c.l.b16 %v1860
          %v2023 = vunpack.c.l.b16 %v1861
          %v2024 = vunpack.c.h.b16 %v1860
          %v2025 = vunpack.c.h.b16 %v1861
          %v2026 = vunpack.c.l.b16 %v1862
          %v2027 = vunpack.c.l.b16 %v1863
          %v2028 = vunpack.c.h.b16 %v1862
          %v2029 = vunpack.c.h.b16 %v1863
          %v2030 = vunpack.c.l.b16 %v1864
          %v2031 = vunpack.c.l.b16 %v1865
          %v2032 = vunpack.c.h.b16 %v1864
          %v2033 = vunpack.c.h.b16 %v1865
          %v2034 = vunpack.c.l.b16 %v1866
          %v2035 = vunpack.c.l.b16 %v1867
          %v2036 = vunpack.c.h.b16 %v1866
          %v2037 = vunpack.c.h.b16 %v1867
          %v2038 = vunpack.c.l.b16 %v1868
          %v2039 = vunpack.c.l.b16 %v1869
          %v2040 = vunpack.c.h.b16 %v1868
          %v2041 = vunpack.c.h.b16 %v1869
          %v2042 = vunpack.c.l.b16 %v1870
          %v2043 = vunpack.c.l.b16 %v1871
          %v2044 = vunpack.c.h.b16 %v1870
          %v2045 = vunpack.c.h.b16 %v1871
          %v2046 = vunpack.c.l.b16 %v1872
          %v2047 = vunpack.c.l.b16 %v1873
          %v2048 = vunpack.c.h.b16 %v1872
          %v2049 = vunpack.c.h.b16 %v1873
          %v2050 = vunpack.c.l.b16 %v1874
          %v2051 = vunpack.c.l.b16 %v1875
          %v2052 = vunpack.c.h.b16 %v1874
          %v2053 = vunpack.c.h.b16 %v1875
          %v2054 = vunpack.c.l.b16 %v1876
          %v2055 = vunpack.c.l.b16 %v1877
          %v2056 = vunpack.c.h.b16 %v1876
          %v2057 = vunpack.c.h.b16 %v1877
          %v2058 = vunpack.c.l.b16 %v1878
          %v2059 = vunpack.c.l.b16 %v1879
          %v2060 = vunpack.c.h.b16 %v1878
          %v2061 = vunpack.c.h.b16 %v1879
          %v2062 = vunpack.c.l.b16 %v1880
          %v2063 = vunpack.c.l.b16 %v1881
          %v2064 = vunpack.c.h.b16 %v1880
          %v2065 = vunpack.c.h.b16 %v1881
          %v2066 = vunpack.c.l.b16 %v1882
          %v2067 = vunpack.c.l.b16 %v1883
          %v2068 = vunpack.c.h.b16 %v1882
          %v2069 = vunpack.c.h.b16 %v1883
          %v2070 = vunpack.c.l.b16 %v1884
          %v2071 = vunpack.c.l.b16 %v1885
          %v2072 = vunpack.c.h.b16 %v1884
          %v2073 = vunpack.c.h.b16 %v1885
          %v2074 = vunpack.c.l.b16 %v1886
          %v2075 = vunpack.c.l.b16 %v1887
          %v2076 = vunpack.c.h.b16 %v1886
          %v2077 = vunpack.c.h.b16 %v1887
          %v2078 = vunpack.c.l.b16 %v1888
          %v2079 = vunpack.c.l.b16 %v1889
          %v2080 = vunpack.c.h.b16 %v1888
          %v2081 = vunpack.c.h.b16 %v1889
          %v2082 = vpack.c.b16 %v1955, %v1954
          %v2083 = vpack.c.b16 %v1957, %v1956
          %v2084 = vpack.c.b16 %v1959, %v1958
          %v2085 = vpack.c.b16 %v1961, %v1960
          %v2086 = vpack.c.b16 %v1963, %v1962
          %v2087 = vpack.c.b16 %v1965, %v1964
          %v2088 = vpack.c.b16 %v1967, %v1966
          %v2089 = vpack.c.b16 %v1969, %v1968
          %v2090 = vpack.c.b16 %v1971, %v1970
          %v2091 = vpack.c.b16 %v1973, %v1972
          %v2092 = vpack.c.b16 %v1975, %v1974
          %v2093 = vpack.c.b16 %v1977, %v1976
          %v2094 = vpack.c.b16 %v1979, %v1978
          %v2095 = vpack.c.b16 %v1981, %v1980
          %v2096 = vpack.c.b16 %v1983, %v1982
          %v2097 = vpack.c.b16 %v1985, %v1984
          %v2098 = vpack.c.b16 %v1987, %v1986
          %v2099 = vpack.c.b16 %v1989, %v1988
          %v2100 = vpack.c.b16 %v1991, %v1990
          %v2101 = vpack.c.b16 %v1993, %v1992
          %v2102 = vpack.c.b16 %v1995, %v1994
          %v2103 = vpack.c.b16 %v1997, %v1996
          %v2104 = vpack.c.b16 %v1999, %v1998
          %v2105 = vpack.c.b16 %v2001, %v2000
          %v2106 = vpack.c.b16 %v2003, %v2002
          %v2107 = vpack.c.b16 %v2005, %v2004
          %v2108 = vpack.c.b16 %v2007, %v2006
          %v2109 = vpack.c.b16 %v2009, %v2008
          %v2110 = vpack.c.b16 %v2011, %v2010
          %v2111 = vpack.c.b16 %v2013, %v2012
          %v2112 = vpack.c.b16 %v2015, %v2014
          %v2113 = vpack.c.b16 %v2017, %v2016
          %v2114 = vpack.c.b16 %v2019, %v2018
          %v2115 = vpack.c.b16 %v2021, %v2020
          %v2116 = vpack.c.b16 %v2023, %v2022
          %v2117 = vpack.c.b16 %v2025, %v2024
          %v2118 = vpack.c.b16 %v2027, %v2026
          %v2119 = vpack.c.b16 %v2029, %v2028
          %v2120 = vpack.c.b16 %v2031, %v2030
          %v2121 = vpack.c.b16 %v2033, %v2032
          %v2122 = vpack.c.b16 %v2035, %v2034
          %v2123 = vpack.c.b16 %v2037, %v2036
          %v2124 = vpack.c.b16 %v2039, %v2038
          %v2125 = vpack.c.b16 %v2041, %v2040
          %v2126 = vpack.c.b16 %v2043, %v2042
          %v2127 = vpack.c.b16 %v2045, %v2044
          %v2128 = vpack.c.b16 %v2047, %v2046
          %v2129 = vpack.c.b16 %v2049, %v2048
          %v2130 = vpack.c.b16 %v2051, %v2050
          %v2131 = vpack.c.b16 %v2053, %v2052
          %v2132 = vpack.c.b16 %v2055, %v2054
          %v2133 = vpack.c.b16 %v2057, %v2056
          %v2134 = vpack.c.b16 %v2059, %v2058
          %v2135 = vpack.c.b16 %v2061, %v2060
          %v2136 = vpack.c.b16 %v2063, %v2062
          %v2137 = vpack.c.b16 %v2065, %v2064
          %v2138 = vpack.c.b16 %v2067, %v2066
          %v2139 = vpack.c.b16 %v2069, %v2068
          %v2140 = vpack.c.b16 %v2071, %v2070
          %v2141 = vpack.c.b16 %v2073, %v2072
          %v2142 = vpack.c.b16 %v2075, %v2074
          %v2143 = vpack.c.b16 %v2077, %v2076
          %v2144 = vpack.c.b16 %v2079, %v2078
          %v2145 = vpack.c.b16 %v2081, %v2080
          %2210 = vst [vmem:[%s294] sm:$0xff] %v2082
          %2211 = vst [vmem:[%s294 + $0x8] sm:$0xff] %v2083
          %2212 = vst [vmem:[%s294 + $0x10] sm:$0xff] %v2084
          %2213 = vst [vmem:[%s294 + $0x18] sm:$0xff] %v2085
          %2214 = vst [vmem:[%s294 + $0x20] sm:$0xff] %v2086
          %2215 = vst [vmem:[%s294 + $0x28] sm:$0xff] %v2087
          %2216 = vst [vmem:[%s294 + $0x30] sm:$0xff] %v2088
          %2217 = vst [vmem:[%s294 + $0x38] sm:$0xff] %v2089
          %2218 = vst [vmem:[%s294 + $0x40] sm:$0xff] %v2090
          %2219 = vst [vmem:[%s294 + $0x48] sm:$0xff] %v2091
          %2220 = vst [vmem:[%s294 + $0x50] sm:$0xff] %v2092
          %2221 = vst [vmem:[%s294 + $0x58] sm:$0xff] %v2093
          %2222 = vst [vmem:[%s294 + $0x60] sm:$0xff] %v2094
          %2223 = vst [vmem:[%s294 + $0x68] sm:$0xff] %v2095
          %2224 = vst [vmem:[%s294 + $0x70] sm:$0xff] %v2096
          %2225 = vst [vmem:[%s294 + $0x78] sm:$0xff] %v2097
          %2226 = vst [vmem:[%s294 + $0x80] sm:$0xff] %v2098
          %2227 = vst [vmem:[%s294 + $0x88] sm:$0xff] %v2099
          %2228 = vst [vmem:[%s294 + $0x90] sm:$0xff] %v2100
          %2229 = vst [vmem:[%s294 + $0x98] sm:$0xff] %v2101
          %2230 = vst [vmem:[%s294 + $0xa0] sm:$0xff] %v2102
          %2231 = vst [vmem:[%s294 + $0xa8] sm:$0xff] %v2103
          %2232 = vst [vmem:[%s294 + $0xb0] sm:$0xff] %v2104
          %2233 = vst [vmem:[%s294 + $0xb8] sm:$0xff] %v2105
          %2234 = vst [vmem:[%s294 + $0xc0] sm:$0xff] %v2106
          %2235 = vst [vmem:[%s294 + $0xc8] sm:$0xff] %v2107
          %2236 = vst [vmem:[%s294 + $0xd0] sm:$0xff] %v2108
          %2237 = vst [vmem:[%s294 + $0xd8] sm:$0xff] %v2109
          %2238 = vst [vmem:[%s294 + $0xe0] sm:$0xff] %v2110
          %2239 = vst [vmem:[%s294 + $0xe8] sm:$0xff] %v2111
          %2240 = vst [vmem:[%s294 + $0xf0] sm:$0xff] %v2112
          %2241 = vst [vmem:[%s294 + $0xf8] sm:$0xff] %v2113
          %2242 = vst [vmem:[%s294 + $0x100] sm:$0xff] %v2114
          %2243 = vst [vmem:[%s294 + $0x108] sm:$0xff] %v2115
          %2244 = vst [vmem:[%s294 + $0x110] sm:$0xff] %v2116
          %2245 = vst [vmem:[%s294 + $0x118] sm:$0xff] %v2117
          %2246 = vst [vmem:[%s294 + $0x120] sm:$0xff] %v2118
          %2247 = vst [vmem:[%s294 + $0x128] sm:$0xff] %v2119
          %2248 = vst [vmem:[%s294 + $0x130] sm:$0xff] %v2120
          %2249 = vst [vmem:[%s294 + $0x138] sm:$0xff] %v2121
          %2250 = vst [vmem:[%s294 + $0x140] sm:$0xff] %v2122
          %2251 = vst [vmem:[%s294 + $0x148] sm:$0xff] %v2123
          %2252 = vst [vmem:[%s294 + $0x150] sm:$0xff] %v2124
          %2253 = vst [vmem:[%s294 + $0x158] sm:$0xff] %v2125
          %2254 = vst [vmem:[%s294 + $0x160] sm:$0xff] %v2126
          %2255 = vst [vmem:[%s294 + $0x168] sm:$0xff] %v2127
          %2256 = vst [vmem:[%s294 + $0x170] sm:$0xff] %v2128
          %2257 = vst [vmem:[%s294 + $0x178] sm:$0xff] %v2129
          %2258 = vst [vmem:[%s294 + $0x180] sm:$0xff] %v2130
          %2259 = vst [vmem:[%s294 + $0x188] sm:$0xff] %v2131
          %2260 = vst [vmem:[%s294 + $0x190] sm:$0xff] %v2132
          %2261 = vst [vmem:[%s294 + $0x198] sm:$0xff] %v2133
          %2262 = vst [vmem:[%s294 + $0x1a0] sm:$0xff] %v2134
          %2263 = vst [vmem:[%s294 + $0x1a8] sm:$0xff] %v2135
          %2264 = vst [vmem:[%s294 + $0x1b0] sm:$0xff] %v2136
          %2265 = vst [vmem:[%s294 + $0x1b8] sm:$0xff] %v2137
          %2266 = vst [vmem:[%s294 + $0x1c0] sm:$0xff] %v2138
          %2267 = vst [vmem:[%s294 + $0x1c8] sm:$0xff] %v2139
          %2268 = vst [vmem:[%s294 + $0x1d0] sm:$0xff] %v2140
          %2269 = vst [vmem:[%s294 + $0x1d8] sm:$0xff] %v2141
          %2270 = vst [vmem:[%s294 + $0x1e0] sm:$0xff] %v2142
          %2271 = vst [vmem:[%s294 + $0x1e8] sm:$0xff] %v2143
          %2272 = vst [vmem:[%s294 + $0x1f0] sm:$0xff] %v2144
          %2273 = vst [vmem:[%s294 + $0x1f8] sm:$0xff] %v2145
        $region52: #{tpu_custom_call.1} parent=31 // pred_fallthru
          _
        %s2274 = sand.u32 %s134, 1
        %s2275 = scalar_lea.sflag [#allocation5], %s2274
        %s2276 = sand.u32 %s134, 1
        %s2277 = smul.addr %s2276, 512
        %s2278 = scalar_lea.vmem [#allocation9], %s2277
        // Predicated region
        $region53: #{tpu_custom_call.1} parent=31 // pred_check
          %p2279 = pneg %p144
        $region54: #{tpu_custom_call.1} parent=31 // pred_check_branch
          %2281 = sbr.rel (%p2279) target = $region56
        $region55: #{tpu_custom_call.1} parent=31 // pred_region
          %s2282 = smul.u32 64, %s28
          %s2283 = smul.u32 2, %s29
          %s2285 = ssub.s32 8192, 8192
          %2286 = vsyncadd %s2275, %s2285
          %s2287 = smul.addr %s2282, 6
          %s2288 = sadd.s32 %s2283, %s2287
          %s2289 = smul.addr %s2288, 64
          %s2290 = scalar_lea.hbm %s3, %s2289
          %s2291 = sshll.u32 %s2278, 4
          %s2292 = int_to_ptr.vmem [resolvable:$true] %s2291
          %2297 = dma.vmem_to_hbm [thread:$0]  %s2292, 8192, %s2290, %s2275, 128, 384, 8
        $region56: #{tpu_custom_call.1} parent=31 // pred_fallthru
          _
      $region32: #{tpu_custom_call.1} parent=5 // pred_fallthru
        _
      %p2298 = scmp.le.s32.totalorder 2, %s18
      // Predicated region
      $region57: #{tpu_custom_call.1} parent=5 // pred_check
        %p2299 = pneg %p2298
      $region58: #{tpu_custom_call.1} parent=5 // pred_check_branch
        %2301 = sbr.rel (%p2299) target = $region60
      $region59: #{tpu_custom_call.1} parent=5 // pred_region
        %s2302 = ssub.s32 %s18, 2
        // Predicated region
        $region61: #{tpu_custom_call.1} parent=59 // pred_check
          %p2303 = pneg %p150
        $region62: #{tpu_custom_call.1} parent=59 // pred_check_branch
          %2305 = sbr.rel (%p2303) target = $region64
        $region63: #{tpu_custom_call.1} parent=59 // pred_region
          %s2306 = sand.u32 %s135, 1
          %s2307 = scalar_lea.sflag [#allocation5], %s2306
          %s2308 = sand.u32 %s135, 1
          %s2309 = smul.addr %s2308, 512
          %s2310 = scalar_lea.vmem [#allocation9], %s2309
          %2311 = dma.done %s2307, 8192
        $region64: #{tpu_custom_call.1} parent=59 // pred_fallthru
          _
      $region60: #{tpu_custom_call.1} parent=5 // pred_fallthru
        _
    $region6: #{tpu_custom_call.1} parent=1 // loop_footer
      %s22 = sadd.s32 1, %s18
    $region7: #{tpu_custom_call.1} parent=1 // loop_footer_branch
      %17 = sbr.rel target = $region3
    $region8: #{tpu_custom_call.1} parent=1 // loop_exit
      _
    %2312 = vsyncpa [#allocation4], 1
    %s2313 = scalar_lea.sflag [#allocation4], 1
    %2314 = vsyncpa %s2313, 1
    %2315 = vsyncpa [#allocation7], 1
    %s2316 = scalar_lea.sflag [#allocation7], 1
    %2317 = vsyncpa %s2316, 1
    %2318 = vsyncpa [#allocation5], 1
    %s2319 = scalar_lea.sflag [#allocation5], 1
    %2320 = vsyncpa %s2319, 1

</llo_original>
